<compile_context>
chip_gen: v5e
topology: v5e:2x2
jax: 0.10.0
libtpu: 0.0.40
codegen_flags: <defaults>
</compile_context>

<pallas_src>
import functools

import jax
import jax.numpy as jnp
from jax.experimental import pallas as pl
from jax.experimental.pallas import tpu as pltpu


def _vmem_capacity_bytes() -> int:
    try:
        return int(pltpu.get_tpu_info().vmem_capacity_bytes)
    except Exception:
        return 64 * 1024 * 1024          # conservative (v7x-sized) fallback


def _memory_config():
    cap = _vmem_capacity_bytes()
    limit = max(int(cap * 3 // 4), 32 * 1024 * 1024)
    if cap >= 96 * 1024 * 1024:          # v5e / v6e: 128 MiB parts
        max_freq, max_sp = 4096, 8192
    else:                                # v7x: 64 MiB per TensorCore
        max_freq, max_sp = 2048, 4096
    return limit, max_freq, max_sp


def _choose_tile(n, c_rows, n_streams, vmem_limit, max_tile):
    """Lane tile: multiple of 128 that fits a double-buffered stream budget.
    No padding copies; ragged last tile is masked / clamped in-kernel."""
    if n <= 128:
        return n                          # single full-extent block
    cap_by_n = 128 * (n // 128)           # keep block <= array extent
    budget = (vmem_limit // 2) // (2 * n_streams * 4 * max(c_rows, 8))
    budget = max(128, (budget // 128) * 128)
    return int(min(max_tile, cap_by_n, budget))


# ----------------------------------------------------------------------------
# Kernel 1: per-channel statistics + in-kernel AdaIN fold -> (B, C, 4) table.
# ----------------------------------------------------------------------------
def _freq_stats_kernel(bm_ref, bp_ref, rm_ref, rp_ref,
                       wrm_ref, brm_ref, wrp_ref, brp_ref,
                       wgm_ref, bgm_ref, wbm_ref, bbm_ref,
                       wgp_ref, bgp_ref, wbp_ref, bbp_ref,
                       par_ref, acc_ref, ctr_ref, *, sf, ts, acc_w):
    s = pl.program_id(1)
    last = pl.num_programs(1) - 1

    bm = bm_ref[0]                        # (C, ts) base magnitude, f32
    bp = bp_ref[0]                        # (C, ts) base phase, f32
    c = bm.shape[0]

    lane = jax.lax.broadcasted_iota(jnp.int32, (c, ts), 1) + s * ts
    valid = lane < sf                     # ragged last tile / no pre-padding

    @pl.when(s == 0)
    def _():
        acc_ref[...] = jnp.zeros_like(acc_ref)
        inv_n0 = 1.0 / float(min(sf, ts))
        # First-tile per-channel means: numeric centers for the variance sums.
        ctr_ref[0] = jnp.sum(jnp.where(valid, bm, 0.0),
                             axis=1, keepdims=True) * inv_n0
        ctr_ref[1] = jnp.sum(jnp.where(valid, bp, 0.0),
                             axis=1, keepdims=True) * inv_n0

    cm = ctr_ref[0]                       # (C, 1)
    cp = ctr_ref[1]
    # where (not multiply) so stale lanes of the ragged tile can never NaN.
    dm = jnp.where(valid, bm - cm, 0.0)
    dp = jnp.where(valid, bp - cp, 0.0)

    # conv_ref -> ReLU on the ref spectrum; bf16 MXU operands, f32 accumulate.
    rfm = jnp.maximum(
        jnp.dot(wrm_ref[...].astype(jnp.bfloat16), rm_ref[0],
                preferred_element_type=jnp.float32) + brm_ref[...], 0.0)
    rfp = jnp.maximum(
        jnp.dot(wrp_ref[...].astype(jnp.bfloat16), rp_ref[0],
                preferred_element_type=jnp.float32) + brp_ref[...], 0.0)
    rfm = jnp.where(valid, rfm, 0.0)
    rfp = jnp.where(valid, rfp, 0.0)

    # Lane-shaped VPU partial accumulation; the only cross-lane (XLU) reduce and
    # the (C, 4) scatter happen once per batch, in the epilogue below.
    def lane_partial(x):
        out = x[:, 0:acc_w]
        for k in range(1, ts // acc_w):
            out = out + x[:, k * acc_w:(k + 1) * acc_w]
        return out

    acc_ref[0] += lane_partial(dm)
    acc_ref[1] += lane_partial(dm * dm)
    acc_ref[2] += lane_partial(dp)
    acc_ref[3] += lane_partial(dp * dp)
    acc_ref[4] += lane_partial(rfm)
    acc_ref[5] += lane_partial(rfp)

    @pl.when(s == last)
    def _():
        inv_n = 1.0 / float(sf)

        def red(k):                       # (C, 1) mean over all sf positions
            return jnp.sum(acc_ref[k], axis=1, keepdims=True) * inv_n

        def fold(center, d_mean, d_msq, pool, wg, bg, wb, bb):
            mean = center + d_mean
            var = jnp.maximum(d_msq - d_mean * d_mean, 0.0)
            inv_std = jax.lax.rsqrt(var + 1e-5)
            gamma = jnp.dot(wg, pool, preferred_element_type=jnp.float32) + bg
            beta = jnp.dot(wb, pool, preferred_element_type=jnp.float32) + bb
            scale = inv_std * (gamma + 1.0)
            return scale, beta - mean * scale

        sc_m, sh_m = fold(ctr_ref[0], red(0), red(1), red(4),
                          wgm_ref[...], bgm_ref[...], wbm_ref[...], bbm_ref[...])
        sc_p, sh_p = fold(ctr_ref[1], red(2), red(3), red(5),
                          wgp_ref[...], bgp_ref[...], wbp_ref[...], bbp_ref[...])

        col = jax.lax.broadcasted_iota(jnp.int32, (c, 4), 1)
        par = jnp.zeros((c, 4), jnp.float32)
        for k, v in enumerate((sc_m, sh_m, sc_p, sh_p)):
            par = jnp.where(col == k, v, par)
        par_ref[0] = par


def freq_stats_pallas(bm, bp, rm, rp, m1, m2, *, sf, ts, vmem_limit):
    B, C, S = bm.shape
    n_tiles = pl.cdiv(S, ts)
    acc_w = 128 if ts % 128 == 0 else ts
    w_r_m, b_r_m, w_g_m, b_g_m, w_b_m, b_b_m = m1
    w_r_p, b_r_p, w_g_p, b_g_p, w_b_p, b_b_p = m2

    data = pl.BlockSpec((1, C, ts), lambda i, s: (i, 0, s))
    wspec = pl.BlockSpec((C, C), lambda i, s: (0, 0))
    bspec = pl.BlockSpec((C, 1), lambda i, s: (0, 0))

    return pl.pallas_call(
        functools.partial(_freq_stats_kernel, sf=sf, ts=ts, acc_w=acc_w),
        out_shape=jax.ShapeDtypeStruct((B, C, 4), jnp.float32),
        grid=(B, n_tiles),
        in_specs=[data, data, data, data,
                  wspec, bspec, wspec, bspec,
                  wspec, bspec, wspec, bspec,
                  wspec, bspec, wspec, bspec],
        out_specs=pl.BlockSpec((1, C, 4), lambda i, s: (i, 0, 0)),
        scratch_shapes=[pltpu.VMEM((6, C, acc_w), jnp.float32),
                        pltpu.VMEM((2, C, 1), jnp.float32)],
        compiler_params=pltpu.CompilerParams(
            dimension_semantics=("parallel", "arbitrary"),
            vmem_limit_bytes=vmem_limit),
    )(bm, bp, rm, rp,
      w_r_m, b_r_m, w_r_p, b_r_p,
      w_g_m, b_g_m, w_b_m, b_b_m,
      w_g_p, b_g_p, w_b_p, b_b_p)


# ----------------------------------------------------------------------------
# Kernel 2: streaming modulation + polar -> cartesian (emits real/imag).
# ----------------------------------------------------------------------------
def _freq_modulate_kernel(par_ref, bm_ref, bp_ref, real_ref, imag_ref):
    par = par_ref[0]                      # (C, 4): scale_m, shift_m, scale_p, shift_p
    mag = bm_ref[0]
    pha = bp_ref[0]
    new_mag = mag * par[:, 0:1] + par[:, 1:2]
    new_pha = pha * par[:, 2:3] + par[:, 3:4]
    # TODO(synk): on v5e the f32 cos/sin may make this EUP-bound; a range-reduced
    # VPU polynomial sincos would be the next lever there.
    real_ref[0] = new_mag * jnp.cos(new_pha)
    imag_ref[0] = new_mag * jnp.sin(new_pha)


def freq_modulate_pallas(par, bm, bp, *, ts, vmem_limit):
    B, C, S = bm.shape
    n_tiles = pl.cdiv(S, ts)
    data = pl.BlockSpec((1, C, ts), lambda i, s: (i, 0, s))
    pspec = pl.BlockSpec((1, C, 4), lambda i, s: (i, 0, 0))
    return pl.pallas_call(
        _freq_modulate_kernel,
        out_shape=(jax.ShapeDtypeStruct((B, C, S), jnp.float32),
                   jax.ShapeDtypeStruct((B, C, S), jnp.float32)),
        grid=(B, n_tiles),
        in_specs=[pspec, data, data],
        out_specs=(data, data),
        compiler_params=pltpu.CompilerParams(
            dimension_semantics=("parallel", "parallel"),
            vmem_limit_bytes=vmem_limit),
    )(par, bm, bp)


# ----------------------------------------------------------------------------
# Kernel 3: final 1x1 conv over concat([new, base]) without the concat.
# ----------------------------------------------------------------------------
def _fuse_conv_kernel(new_ref, base_ref, w_ref, b_ref, out_ref, *, c):
    new_t = new_ref[0].astype(jnp.bfloat16)
    base_t = base_ref[0].astype(jnp.bfloat16)
    w = w_ref[...].astype(jnp.bfloat16)   # single (C, 2C) weight, sliced in VMEM
    out_ref[0] = (
        jnp.dot(w[:, :c], new_t, preferred_element_type=jnp.float32)
        + jnp.dot(w[:, c:], base_t, preferred_element_type=jnp.float32)
        + b_ref[...])


def fuse_conv_pallas(new, base, w, bias, *, ts, vmem_limit):
    B, C, S = new.shape
    n_tiles = pl.cdiv(S, ts)
    data = pl.BlockSpec((1, C, ts), lambda i, s: (i, 0, s))
    return pl.pallas_call(
        functools.partial(_fuse_conv_kernel, c=C),
        out_shape=jax.ShapeDtypeStruct((B, C, S), jnp.float32),
        grid=(B, n_tiles),
        in_specs=[data, data,
                  pl.BlockSpec((C, 2 * C), lambda i, s: (0, 0)),
                  pl.BlockSpec((C, 1), lambda i, s: (0, 0))],
        out_specs=data,
        compiler_params=pltpu.CompilerParams(
            dimension_semantics=("parallel", "parallel"),
            vmem_limit_bytes=vmem_limit),
    )(new, base, w, bias)


# ----------------------------------------------------------------------------
# Parameters + forward pass.
# ----------------------------------------------------------------------------
def init_params(key, channels):
    c = channels
    ks = jax.random.split(key, 14)

    def conv_params(kw, kb, cout, cin):
        w = jax.random.normal(kw, (cout, cin), jnp.float32) * 0.2
        b = jax.random.normal(kb, (cout, 1), jnp.float32) * 0.1
        return w, b

    def adain_params(keys):
        w_r, b_r = conv_params(keys[0], keys[1], c, c)
        w_g, b_g = conv_params(keys[2], keys[3], c, c)
        w_b, b_b = conv_params(keys[4], keys[5], c, c)
        return (w_r, b_r, w_g, b_g, w_b, b_b)

    params = {"m1": adain_params(ks[0:6]), "m2": adain_params(ks[6:12])}
    params["conv_w"], params["conv_b"] = conv_params(ks[12], ks[13], c, 2 * c)
    return params


def sfm_block_forward(base, ref, params):
    b, c, h, w = base.shape
    base = base.astype(jnp.float32)
    ref = ref.astype(jnp.float32)

    # TODO(synk): rfft2/irfft2 have no Pallas primitive; they stay on XLA's FFT.
    # TODO(synk): abs/angle of the complex spectrum stay in XLA (in-kernel atan2
    # is not a guaranteed Mosaic lowering); everything downstream is fused.
    base_fre = jnp.fft.rfft2(base, norm="backward")
    ref_fre = jnp.fft.rfft2(ref, norm="backward")
    hf, wf = base_fre.shape[2], base_fre.shape[3]
    sf = hf * wf

    # Base spectrum stays f32 (variance + phase accuracy).  The ref spectrum
    # only feeds conv->relu->pool statistics, so it is stored bf16 (the cast
    # fuses into the abs/angle epilogue -> half the HBM bytes on 2 of the 4
    # stats-kernel streams).
    bm = jnp.abs(base_fre).reshape(b, c, sf)
    bp = jnp.angle(base_fre).reshape(b, c, sf)
    rm = jnp.abs(ref_fre).reshape(b, c, sf).astype(jnp.bfloat16)
    rp = jnp.angle(ref_fre).reshape(b, c, sf).astype(jnp.bfloat16)

    vmem_limit, max_freq, max_sp = _memory_config()
    ts_f = _choose_tile(sf, c, 4, vmem_limit, max_freq)

    # Pass 1: stats + in-kernel AdaIN fold -> (B, C, 4) scale/shift table.
    par = freq_stats_pallas(bm, bp, rm, rp, params["m1"], params["m2"],
                            sf=sf, ts=ts_f, vmem_limit=vmem_limit)

    # Pass 2: streaming modulation + polar->cartesian.
    real, imag = freq_modulate_pallas(par, bm, bp, ts=ts_f,
                                      vmem_limit=vmem_limit)
    fre_out = jax.lax.complex(real, imag).reshape(b, c, hf, wf)
    new = jnp.fft.irfft2(fre_out, s=(h, w), norm="backward").astype(jnp.float32)

    # Pass 3: 1x1 conv on concat([new, base]) with the weight sliced in-kernel.
    s = h * w
    ts_s = _choose_tile(s, c, 3, vmem_limit, max_sp)
    out = fuse_conv_pallas(new.reshape(b, c, s), base.reshape(b, c, s),
                           params["conv_w"], params["conv_b"],
                           ts=ts_s, vmem_limit=vmem_limit)
    return out.reshape(b, c, h, w)


# ----------------------------------------------------------------------------
# Pure-JAX reference (mirrors the PyTorch module) for a correctness check.
# ----------------------------------------------------------------------------
def _adain_reference(base, ref, w_r, b_r, w_g, b_g, w_b, b_b):
    mean = jnp.mean(base, axis=(2, 3), keepdims=True)
    var = jnp.mean((base - mean) ** 2, axis=(2, 3), keepdims=True)
    base_n = (base - mean) * jax.lax.rsqrt(var + 1e-5)
    rf = jnp.einsum("oc,bchw->bohw", w_r, ref) + b_r[None, :, :, None]
    rf = jnp.maximum(rf, 0.0)
    pool = jnp.mean(rf, axis=(2, 3), keepdims=True)
    gamma = jnp.einsum("oc,bcxy->boxy", w_g, pool) + b_g[None, :, :, None]
    beta = jnp.einsum("oc,bcxy->boxy", w_b, pool) + b_b[None, :, :, None]
    return base_n * (gamma + 1.0) + beta


def sfm_block_reference(base, ref, params):
    b, c, h, w = base.shape
    bf = jnp.fft.rfft2(base, norm="backward")
    rf = jnp.fft.rfft2(ref, norm="backward")
    new_mag = _adain_reference(jnp.abs(bf), jnp.abs(rf), *params["m1"])
    new_pha = _adain_reference(jnp.angle(bf), jnp.angle(rf), *params["m2"])
    real = new_mag * jnp.cos(new_pha)
    imag = new_mag * jnp.sin(new_pha)
    new = jnp.fft.irfft2(jax.lax.complex(real, imag), s=(h, w), norm="backward")
    cat = jnp.concatenate([new, base], axis=1)
    return (jnp.einsum("oc,bchw->bohw", params["conv_w"], cat)
            + params["conv_b"][None, :, :, None])


if __name__ == "__main__":
    key = jax.random.PRNGKey(0)
    k_base, k_ref, k_params = jax.random.split(key, 3)

    B, C, H, W = 2, 4, 16, 16
    base = jax.random.normal(k_base, (B, C, H, W), jnp.float32)
    ref = jax.random.normal(k_ref, (B, C, H, W), jnp.float32)
    params = init_params(k_params, C)

    fwd = jax.jit(sfm_block_forward)
    out = jax.block_until_ready(fwd(base, ref, params))
    assert out.shape == (B, C, H, W)
    assert bool(jnp.all(jnp.isfinite(out)))

    # Loose tolerance: bf16 MXU operands / bf16 ref-spectrum storage in the
    # kernels vs. the plain-f32 XLA reference.
    ref_out = sfm_block_reference(base, ref, params)
    max_err = float(jnp.max(jnp.abs(out - ref_out)))
    assert bool(jnp.allclose(out, ref_out, rtol=5e-2, atol=5e-2)), max_err

    print("KERNEL_OK")
</pallas_src>

<mosaic_0001>
module attributes {stable_mosaic.version = 11 : i64} {
  func.func @_freq_stats_kernel(%arg0: i32, %arg1: i32, %arg2: memref<1x4x128xf32, #tpu.memory_space<vmem>>, %arg3: memref<1x4x128xf32, #tpu.memory_space<vmem>>, %arg4: memref<1x4x128xbf16, #tpu.memory_space<vmem>>, %arg5: memref<1x4x128xbf16, #tpu.memory_space<vmem>>, %arg6: memref<4x4xf32, #tpu.memory_space<vmem>>, %arg7: memref<4x1xf32, #tpu.memory_space<vmem>>, %arg8: memref<4x4xf32, #tpu.memory_space<vmem>>, %arg9: memref<4x1xf32, #tpu.memory_space<vmem>>, %arg10: memref<4x4xf32, #tpu.memory_space<vmem>>, %arg11: memref<4x1xf32, #tpu.memory_space<vmem>>, %arg12: memref<4x4xf32, #tpu.memory_space<vmem>>, %arg13: memref<4x1xf32, #tpu.memory_space<vmem>>, %arg14: memref<4x4xf32, #tpu.memory_space<vmem>>, %arg15: memref<4x1xf32, #tpu.memory_space<vmem>>, %arg16: memref<4x4xf32, #tpu.memory_space<vmem>>, %arg17: memref<4x1xf32, #tpu.memory_space<vmem>>, %arg18: memref<1x4x4xf32, #tpu.memory_space<vmem>>, %arg19: memref<6x4x128xf32, #tpu.memory_space<vmem>>, %arg20: memref<2x4x1xf32, #tpu.memory_space<vmem>>) attributes {dimension_semantics = [#tpu.dimension_semantics<parallel>, #tpu.dimension_semantics<arbitrary>], iteration_bounds = array<i64: 2, 2>, scalar_prefetch = 0 : i64, scratch_operands = 2 : i64, tpu.core_type = #tpu.core_type<tc>, window_params = [{transform_indices = @transform_0, window_bounds = array<i64: 1, 4, 128>}, {transform_indices = @transform_1, window_bounds = array<i64: 1, 4, 128>}, {transform_indices = @transform_2, window_bounds = array<i64: 1, 4, 128>}, {transform_indices = @transform_3, window_bounds = array<i64: 1, 4, 128>}, {pipeline_mode = #tpu.pipeline_mode<synchronous>, transform_indices = @transform_4, window_bounds = array<i64: 4, 4>}, {pipeline_mode = #tpu.pipeline_mode<synchronous>, transform_indices = @transform_5, window_bounds = array<i64: 4, 1>}, {pipeline_mode = #tpu.pipeline_mode<synchronous>, transform_indices = @transform_6, window_bounds = array<i64: 4, 4>}, {pipeline_mode = #tpu.pipeline_mode<synchronous>, transform_indices = @transform_7, window_bounds = array<i64: 4, 1>}, {pipeline_mode = #tpu.pipeline_mode<synchronous>, transform_indices = @transform_8, window_bounds = array<i64: 4, 4>}, {pipeline_mode = #tpu.pipeline_mode<synchronous>, transform_indices = @transform_9, window_bounds = array<i64: 4, 1>}, {pipeline_mode = #tpu.pipeline_mode<synchronous>, transform_indices = @transform_10, window_bounds = array<i64: 4, 4>}, {pipeline_mode = #tpu.pipeline_mode<synchronous>, transform_indices = @transform_11, window_bounds = array<i64: 4, 1>}, {pipeline_mode = #tpu.pipeline_mode<synchronous>, transform_indices = @transform_12, window_bounds = array<i64: 4, 4>}, {pipeline_mode = #tpu.pipeline_mode<synchronous>, transform_indices = @transform_13, window_bounds = array<i64: 4, 1>}, {pipeline_mode = #tpu.pipeline_mode<synchronous>, transform_indices = @transform_14, window_bounds = array<i64: 4, 4>}, {pipeline_mode = #tpu.pipeline_mode<synchronous>, transform_indices = @transform_15, window_bounds = array<i64: 4, 1>}, {transform_indices = @transform_16, window_bounds = array<i64: 1, 4, 4>}]} {
    %c0 = arith.constant 0 : index
    %c0_0 = arith.constant 0 : index
    %c0_1 = arith.constant 0 : index
    %0 = vector.load %arg2[%c0, %c0_0, %c0_1] : memref<1x4x128xf32, #tpu.memory_space<vmem>>, vector<1x4x128xf32>
    %1 = vector.shape_cast %0 : vector<1x4x128xf32> to vector<4x128xf32>
    %c0_2 = arith.constant 0 : index
    %c0_3 = arith.constant 0 : index
    %c0_4 = arith.constant 0 : index
    %2 = vector.load %arg3[%c0_2, %c0_3, %c0_4] : memref<1x4x128xf32, #tpu.memory_space<vmem>>, vector<1x4x128xf32>
    %3 = vector.shape_cast %2 : vector<1x4x128xf32> to vector<4x128xf32>
    %4 = tpu.iota {dimensions = array<i32: 1>} : vector<4x128xi32>
    %c128_i32 = arith.constant 128 : i32
    %5 = arith.muli %arg1, %c128_i32 : i32
    %6 = vector.broadcast %5 : i32 to vector<4x128xi32>
    %7 = arith.addi %4, %6 : vector<4x128xi32>
    %c144_i32 = arith.constant 144 : i32
    %8 = vector.broadcast %c144_i32 : i32 to vector<4x128xi32>
    %9 = arith.cmpi slt, %7, %8 : vector<4x128xi32>
    %c0_i32 = arith.constant 0 : i32
    %10 = arith.cmpi eq, %arg1, %c0_i32 : i32
    %11 = arith.extui %10 : i1 to i32
    %c0_i32_5 = arith.constant 0 : i32
    %12 = arith.cmpi ne, %11, %c0_i32_5 : i32
    scf.if %12 {
      %cst_65 = arith.constant 0.000000e+00 : f32
      %90 = vector.broadcast %cst_65 : f32 to vector<6x4x128xf32>
      %c0_66 = arith.constant 0 : index
      %c0_67 = arith.constant 0 : index
      %c0_68 = arith.constant 0 : index
      %91 = vector.load %arg19[%c0_66, %c0_67, %c0_68] : memref<6x4x128xf32, #tpu.memory_space<vmem>>, vector<6x4x128xf32>
      tpu.vector_store %arg19[%c0_66, %c0_67, %c0_68], %90 {strides = array<i32>} : memref<6x4x128xf32, #tpu.memory_space<vmem>>, vector<6x4x128xf32>,
      %cst_69 = arith.constant 0.000000e+00 : f32
      %92 = vector.broadcast %cst_69 : f32 to vector<4x128xf32>
      %93 = arith.select %9, %1, %92 : vector<4x128xi1>, vector<4x128xf32>
      %cst_70 = arith.constant dense<0.000000e+00> : vector<4xf32>
      %94 = vector.multi_reduction <add>, %93, %cst_70 [1] : vector<4x128xf32> to vector<4xf32>
      %95 = vector.shape_cast %94 : vector<4xf32> to vector<4x1xf32>
      %cst_71 = arith.constant 7.812500e-03 : f32
      %96 = vector.broadcast %cst_71 : f32 to vector<4x1xf32>
      %97 = arith.mulf %95, %96 : vector<4x1xf32>
      %c0_72 = arith.constant 0 : index
      %c0_73 = arith.constant 0 : index
      %c0_74 = arith.constant 0 : index
      %98 = vector.load %arg20[%c0_72, %c0_73, %c0_74] : memref<2x4x1xf32, #tpu.memory_space<vmem>>, vector<1x4x1xf32>
      %99 = vector.shape_cast %98 : vector<1x4x1xf32> to vector<4x1xf32>
      %100 = vector.shape_cast %97 : vector<4x1xf32> to vector<1x4x1xf32>
      tpu.vector_store %arg20[%c0_72, %c0_73, %c0_74], %100 {strides = array<i32>} : memref<2x4x1xf32, #tpu.memory_space<vmem>>, vector<1x4x1xf32>,
      %cst_75 = arith.constant 0.000000e+00 : f32
      %101 = vector.broadcast %cst_75 : f32 to vector<4x128xf32>
      %102 = arith.select %9, %3, %101 : vector<4x128xi1>, vector<4x128xf32>
      %cst_76 = arith.constant dense<0.000000e+00> : vector<4xf32>
      %103 = vector.multi_reduction <add>, %102, %cst_76 [1] : vector<4x128xf32> to vector<4xf32>
      %104 = vector.shape_cast %103 : vector<4xf32> to vector<4x1xf32>
      %cst_77 = arith.constant 7.812500e-03 : f32
      %105 = vector.broadcast %cst_77 : f32 to vector<4x1xf32>
      %106 = arith.mulf %104, %105 : vector<4x1xf32>
      %c1_78 = arith.constant 1 : index
      %c0_79 = arith.constant 0 : index
      %c0_80 = arith.constant 0 : index
      %107 = vector.load %arg20[%c1_78, %c0_79, %c0_80] : memref<2x4x1xf32, #tpu.memory_space<vmem>>, vector<1x4x1xf32>
      %108 = vector.shape_cast %107 : vector<1x4x1xf32> to vector<4x1xf32>
      %109 = vector.shape_cast %106 : vector<4x1xf32> to vector<1x4x1xf32>
      tpu.vector_store %arg20[%c1_78, %c0_79, %c0_80], %109 {strides = array<i32>} : memref<2x4x1xf32, #tpu.memory_space<vmem>>, vector<1x4x1xf32>,
    } else {
    }
    %c0_6 = arith.constant 0 : index
    %c0_7 = arith.constant 0 : index
    %c0_8 = arith.constant 0 : index
    %13 = vector.load %arg20[%c0_6, %c0_7, %c0_8] : memref<2x4x1xf32, #tpu.memory_space<vmem>>, vector<1x4x1xf32>
    %14 = vector.shape_cast %13 : vector<1x4x1xf32> to vector<4x1xf32>
    %c1 = arith.constant 1 : index
    %c0_9 = arith.constant 0 : index
    %c0_10 = arith.constant 0 : index
    %15 = vector.load %arg20[%c1, %c0_9, %c0_10] : memref<2x4x1xf32, #tpu.memory_space<vmem>>, vector<1x4x1xf32>
    %16 = vector.shape_cast %15 : vector<1x4x1xf32> to vector<4x1xf32>
    %17 = vector.broadcast %14 : vector<4x1xf32> to vector<4x128xf32>
    %18 = arith.subf %1, %17 : vector<4x128xf32>
    %cst = arith.constant 0.000000e+00 : f32
    %19 = vector.broadcast %cst : f32 to vector<4x128xf32>
    %20 = arith.select %9, %18, %19 : vector<4x128xi1>, vector<4x128xf32>
    %21 = vector.broadcast %16 : vector<4x1xf32> to vector<4x128xf32>
    %22 = arith.subf %3, %21 : vector<4x128xf32>
    %cst_11 = arith.constant 0.000000e+00 : f32
    %23 = vector.broadcast %cst_11 : f32 to vector<4x128xf32>
    %24 = arith.select %9, %22, %23 : vector<4x128xi1>, vector<4x128xf32>
    %c0_12 = arith.constant 0 : index
    %c0_13 = arith.constant 0 : index
    %25 = vector.load %arg6[%c0_12, %c0_13] : memref<4x4xf32, #tpu.memory_space<vmem>>, vector<4x4xf32>
    %26 = arith.truncf %25 : vector<4x4xf32> to vector<4x4xbf16>
    %c0_14 = arith.constant 0 : index
    %c0_15 = arith.constant 0 : index
    %c0_16 = arith.constant 0 : index
    %27 = vector.load %arg4[%c0_14, %c0_15, %c0_16] : memref<1x4x128xbf16, #tpu.memory_space<vmem>>, vector<1x4x128xbf16>
    %28 = vector.shape_cast %27 : vector<1x4x128xbf16> to vector<4x128xbf16>
    %cst_17 = arith.constant dense<0.000000e+00> : vector<4x128xf32>
    %29 = tpu.matmul %26, %28, %cst_17 {dimension_numbers = #tpu.dot_dimension_numbers<[1], [0], [0], [1], [0, 0, 1, 1], [], []>} : vector<4x4xbf16>, vector<4x128xbf16>, vector<4x128xf32> -> vector<4x128xf32>
    %c0_18 = arith.constant 0 : index
    %c0_19 = arith.constant 0 : index
    %30 = vector.load %arg7[%c0_18, %c0_19] : memref<4x1xf32, #tpu.memory_space<vmem>>, vector<4x1xf32>
    %31 = vector.broadcast %30 : vector<4x1xf32> to vector<4x128xf32>
    %32 = arith.addf %29, %31 : vector<4x128xf32>
    %cst_20 = arith.constant 0.000000e+00 : f32
    %33 = vector.broadcast %cst_20 : f32 to vector<4x128xf32>
    %34 = arith.maximumf %32, %33 : vector<4x128xf32>
    %c0_21 = arith.constant 0 : index
    %c0_22 = arith.constant 0 : index
    %35 = vector.load %arg8[%c0_21, %c0_22] : memref<4x4xf32, #tpu.memory_space<vmem>>, vector<4x4xf32>
    %36 = arith.truncf %35 : vector<4x4xf32> to vector<4x4xbf16>
    %c0_23 = arith.constant 0 : index
    %c0_24 = arith.constant 0 : index
    %c0_25 = arith.constant 0 : index
    %37 = vector.load %arg5[%c0_23, %c0_24, %c0_25] : memref<1x4x128xbf16, #tpu.memory_space<vmem>>, vector<1x4x128xbf16>
    %38 = vector.shape_cast %37 : vector<1x4x128xbf16> to vector<4x128xbf16>
    %cst_26 = arith.constant dense<0.000000e+00> : vector<4x128xf32>
    %39 = tpu.matmul %36, %38, %cst_26 {dimension_numbers = #tpu.dot_dimension_numbers<[1], [0], [0], [1], [0, 0, 1, 1], [], []>} : vector<4x4xbf16>, vector<4x128xbf16>, vector<4x128xf32> -> vector<4x128xf32>
    %c0_27 = arith.constant 0 : index
    %c0_28 = arith.constant 0 : index
    %40 = vector.load %arg9[%c0_27, %c0_28] : memref<4x1xf32, #tpu.memory_space<vmem>>, vector<4x1xf32>
    %41 = vector.broadcast %40 : vector<4x1xf32> to vector<4x128xf32>
    %42 = arith.addf %39, %41 : vector<4x128xf32>
    %cst_29 = arith.constant 0.000000e+00 : f32
    %43 = vector.broadcast %cst_29 : f32 to vector<4x128xf32>
    %44 = arith.maximumf %42, %43 : vector<4x128xf32>
    %cst_30 = arith.constant 0.000000e+00 : f32
    %45 = vector.broadcast %cst_30 : f32 to vector<4x128xf32>
    %46 = arith.select %9, %34, %45 : vector<4x128xi1>, vector<4x128xf32>
    %cst_31 = arith.constant 0.000000e+00 : f32
    %47 = vector.broadcast %cst_31 : f32 to vector<4x128xf32>
    %48 = arith.select %9, %44, %47 : vector<4x128xi1>, vector<4x128xf32>
    %c0_32 = arith.constant 0 : index
    %c0_33 = arith.constant 0 : index
    %c0_34 = arith.constant 0 : index
    %49 = vector.load %arg19[%c0_32, %c0_33, %c0_34] : memref<6x4x128xf32, #tpu.memory_space<vmem>>, vector<1x4x128xf32>
    %50 = vector.shape_cast %49 : vector<1x4x128xf32> to vector<4x128xf32>
    %51 = arith.addf %50, %20 : vector<4x128xf32>
    %c0_35 = arith.constant 0 : index
    %c0_36 = arith.constant 0 : index
    %c0_37 = arith.constant 0 : index
    %52 = vector.load %arg19[%c0_35, %c0_36, %c0_37] : memref<6x4x128xf32, #tpu.memory_space<vmem>>, vector<1x4x128xf32>
    %53 = vector.shape_cast %52 : vector<1x4x128xf32> to vector<4x128xf32>
    %54 = vector.shape_cast %51 : vector<4x128xf32> to vector<1x4x128xf32>
    tpu.vector_store %arg19[%c0_35, %c0_36, %c0_37], %54 {strides = array<i32>} : memref<6x4x128xf32, #tpu.memory_space<vmem>>, vector<1x4x128xf32>,
    %c1_38 = arith.constant 1 : index
    %c0_39 = arith.constant 0 : index
    %c0_40 = arith.constant 0 : index
    %55 = vector.load %arg19[%c1_38, %c0_39, %c0_40] : memref<6x4x128xf32, #tpu.memory_space<vmem>>, vector<1x4x128xf32>
    %56 = vector.shape_cast %55 : vector<1x4x128xf32> to vector<4x128xf32>
    %57 = arith.mulf %20, %20 : vector<4x128xf32>
    %58 = arith.addf %56, %57 : vector<4x128xf32>
    %c1_41 = arith.constant 1 : index
    %c0_42 = arith.constant 0 : index
    %c0_43 = arith.constant 0 : index
    %59 = vector.load %arg19[%c1_41, %c0_42, %c0_43] : memref<6x4x128xf32, #tpu.memory_space<vmem>>, vector<1x4x128xf32>
    %60 = vector.shape_cast %59 : vector<1x4x128xf32> to vector<4x128xf32>
    %61 = vector.shape_cast %58 : vector<4x128xf32> to vector<1x4x128xf32>
    tpu.vector_store %arg19[%c1_41, %c0_42, %c0_43], %61 {strides = array<i32>} : memref<6x4x128xf32, #tpu.memory_space<vmem>>, vector<1x4x128xf32>,
    %c2 = arith.constant 2 : index
    %c0_44 = arith.constant 0 : index
    %c0_45 = arith.constant 0 : index
    %62 = vector.load %arg19[%c2, %c0_44, %c0_45] : memref<6x4x128xf32, #tpu.memory_space<vmem>>, vector<1x4x128xf32>
    %63 = vector.shape_cast %62 : vector<1x4x128xf32> to vector<4x128xf32>
    %64 = arith.addf %63, %24 : vector<4x128xf32>
    %c2_46 = arith.constant 2 : index
    %c0_47 = arith.constant 0 : index
    %c0_48 = arith.constant 0 : index
    %65 = vector.load %arg19[%c2_46, %c0_47, %c0_48] : memref<6x4x128xf32, #tpu.memory_space<vmem>>, vector<1x4x128xf32>
    %66 = vector.shape_cast %65 : vector<1x4x128xf32> to vector<4x128xf32>
    %67 = vector.shape_cast %64 : vector<4x128xf32> to vector<1x4x128xf32>
    tpu.vector_store %arg19[%c2_46, %c0_47, %c0_48], %67 {strides = array<i32>} : memref<6x4x128xf32, #tpu.memory_space<vmem>>, vector<1x4x128xf32>,
    %c3 = arith.constant 3 : index
    %c0_49 = arith.constant 0 : index
    %c0_50 = arith.constant 0 : index
    %68 = vector.load %arg19[%c3, %c0_49, %c0_50] : memref<6x4x128xf32, #tpu.memory_space<vmem>>, vector<1x4x128xf32>
    %69 = vector.shape_cast %68 : vector<1x4x128xf32> to vector<4x128xf32>
    %70 = arith.mulf %24, %24 : vector<4x128xf32>
    %71 = arith.addf %69, %70 : vector<4x128xf32>
    %c3_51 = arith.constant 3 : index
    %c0_52 = arith.constant 0 : index
    %c0_53 = arith.constant 0 : index
    %72 = vector.load %arg19[%c3_51, %c0_52, %c0_53] : memref<6x4x128xf32, #tpu.memory_space<vmem>>, vector<1x4x128xf32>
    %73 = vector.shape_cast %72 : vector<1x4x128xf32> to vector<4x128xf32>
    %74 = vector.shape_cast %71 : vector<4x128xf32> to vector<1x4x128xf32>
    tpu.vector_store %arg19[%c3_51, %c0_52, %c0_53], %74 {strides = array<i32>} : memref<6x4x128xf32, #tpu.memory_space<vmem>>, vector<1x4x128xf32>,
    %c4 = arith.constant 4 : index
    %c0_54 = arith.constant 0 : index
    %c0_55 = arith.constant 0 : index
    %75 = vector.load %arg19[%c4, %c0_54, %c0_55] : memref<6x4x128xf32, #tpu.memory_space<vmem>>, vector<1x4x128xf32>
    %76 = vector.shape_cast %75 : vector<1x4x128xf32> to vector<4x128xf32>
    %77 = arith.addf %76, %46 : vector<4x128xf32>
    %c4_56 = arith.constant 4 : index
    %c0_57 = arith.constant 0 : index
    %c0_58 = arith.constant 0 : index
    %78 = vector.load %arg19[%c4_56, %c0_57, %c0_58] : memref<6x4x128xf32, #tpu.memory_space<vmem>>, vector<1x4x128xf32>
    %79 = vector.shape_cast %78 : vector<1x4x128xf32> to vector<4x128xf32>
    %80 = vector.shape_cast %77 : vector<4x128xf32> to vector<1x4x128xf32>
    tpu.vector_store %arg19[%c4_56, %c0_57, %c0_58], %80 {strides = array<i32>} : memref<6x4x128xf32, #tpu.memory_space<vmem>>, vector<1x4x128xf32>,
    %c5 = arith.constant 5 : index
    %c0_59 = arith.constant 0 : index
    %c0_60 = arith.constant 0 : index
    %81 = vector.load %arg19[%c5, %c0_59, %c0_60] : memref<6x4x128xf32, #tpu.memory_space<vmem>>, vector<1x4x128xf32>
    %82 = vector.shape_cast %81 : vector<1x4x128xf32> to vector<4x128xf32>
    %83 = arith.addf %82, %48 : vector<4x128xf32>
    %c5_61 = arith.constant 5 : index
    %c0_62 = arith.constant 0 : index
    %c0_63 = arith.constant 0 : index
    %84 = vector.load %arg19[%c5_61, %c0_62, %c0_63] : memref<6x4x128xf32, #tpu.memory_space<vmem>>, vector<1x4x128xf32>
    %85 = vector.shape_cast %84 : vector<1x4x128xf32> to vector<4x128xf32>
    %86 = vector.shape_cast %83 : vector<4x128xf32> to vector<1x4x128xf32>
    tpu.vector_store %arg19[%c5_61, %c0_62, %c0_63], %86 {strides = array<i32>} : memref<6x4x128xf32, #tpu.memory_space<vmem>>, vector<1x4x128xf32>,
    %c1_i32 = arith.constant 1 : i32
    %87 = arith.cmpi eq, %arg1, %c1_i32 : i32
    %88 = arith.extui %87 : i1 to i32
    %c0_i32_64 = arith.constant 0 : i32
    %89 = arith.cmpi ne, %88, %c0_i32_64 : i32
    scf.if %89 {
      %c0_65 = arith.constant 0 : index
      %c0_66 = arith.constant 0 : index
      %c0_67 = arith.constant 0 : index
      %90 = vector.load %arg20[%c0_65, %c0_66, %c0_67] : memref<2x4x1xf32, #tpu.memory_space<vmem>>, vector<1x4x1xf32>
      %91 = vector.shape_cast %90 : vector<1x4x1xf32> to vector<4x1xf32>
      %c0_68 = arith.constant 0 : index
      %c0_69 = arith.constant 0 : index
      %c0_70 = arith.constant 0 : index
      %92 = vector.load %arg19[%c0_68, %c0_69, %c0_70] : memref<6x4x128xf32, #tpu.memory_space<vmem>>, vector<1x4x128xf32>
      %93 = vector.shape_cast %92 : vector<1x4x128xf32> to vector<4x128xf32>
      %cst_71 = arith.constant dense<0.000000e+00> : vector<4xf32>
      %94 = vector.multi_reduction <add>, %93, %cst_71 [1] : vector<4x128xf32> to vector<4xf32>
      %95 = vector.shape_cast %94 : vector<4xf32> to vector<4x1xf32>
      %cst_72 = arith.constant 0.0069444445 : f32
      %96 = vector.broadcast %cst_72 : f32 to vector<4x1xf32>
      %97 = arith.mulf %95, %96 : vector<4x1xf32>
      %c1_73 = arith.constant 1 : index
      %c0_74 = arith.constant 0 : index
      %c0_75 = arith.constant 0 : index
      %98 = vector.load %arg19[%c1_73, %c0_74, %c0_75] : memref<6x4x128xf32, #tpu.memory_space<vmem>>, vector<1x4x128xf32>
      %99 = vector.shape_cast %98 : vector<1x4x128xf32> to vector<4x128xf32>
      %cst_76 = arith.constant dense<0.000000e+00> : vector<4xf32>
      %100 = vector.multi_reduction <add>, %99, %cst_76 [1] : vector<4x128xf32> to vector<4xf32>
      %101 = vector.shape_cast %100 : vector<4xf32> to vector<4x1xf32>
      %cst_77 = arith.constant 0.0069444445 : f32
      %102 = vector.broadcast %cst_77 : f32 to vector<4x1xf32>
      %103 = arith.mulf %101, %102 : vector<4x1xf32>
      %c4_78 = arith.constant 4 : index
      %c0_79 = arith.constant 0 : index
      %c0_80 = arith.constant 0 : index
      %104 = vector.load %arg19[%c4_78, %c0_79, %c0_80] : memref<6x4x128xf32, #tpu.memory_space<vmem>>, vector<1x4x128xf32>
      %105 = vector.shape_cast %104 : vector<1x4x128xf32> to vector<4x128xf32>
      %cst_81 = arith.constant dense<0.000000e+00> : vector<4xf32>
      %106 = vector.multi_reduction <add>, %105, %cst_81 [1] : vector<4x128xf32> to vector<4xf32>
      %107 = vector.shape_cast %106 : vector<4xf32> to vector<4x1xf32>
      %cst_82 = arith.constant 0.0069444445 : f32
      %108 = vector.broadcast %cst_82 : f32 to vector<4x1xf32>
      %109 = arith.mulf %107, %108 : vector<4x1xf32>
      %c0_83 = arith.constant 0 : index
      %c0_84 = arith.constant 0 : index
      %110 = vector.load %arg10[%c0_83, %c0_84] : memref<4x4xf32, #tpu.memory_space<vmem>>, vector<4x4xf32>
      %c0_85 = arith.constant 0 : index
      %c0_86 = arith.constant 0 : index
      %111 = vector.load %arg11[%c0_85, %c0_86] : memref<4x1xf32, #tpu.memory_space<vmem>>, vector<4x1xf32>
      %c0_87 = arith.constant 0 : index
      %c0_88 = arith.constant 0 : index
      %112 = vector.load %arg12[%c0_87, %c0_88] : memref<4x4xf32, #tpu.memory_space<vmem>>, vector<4x4xf32>
      %c0_89 = arith.constant 0 : index
      %c0_90 = arith.constant 0 : index
      %113 = vector.load %arg13[%c0_89, %c0_90] : memref<4x1xf32, #tpu.memory_space<vmem>>, vector<4x1xf32>
      %114 = arith.addf %91, %97 : vector<4x1xf32>
      %115 = arith.mulf %97, %97 : vector<4x1xf32>
      %116 = arith.subf %103, %115 : vector<4x1xf32>
      %cst_91 = arith.constant 0.000000e+00 : f32
      %117 = vector.broadcast %cst_91 : f32 to vector<4x1xf32>
      %118 = arith.maximumf %116, %117 : vector<4x1xf32>
      %cst_92 = arith.constant 9.99999974E-6 : f32
      %119 = vector.broadcast %cst_92 : f32 to vector<4x1xf32>
      %120 = arith.addf %118, %119 : vector<4x1xf32>
      %121 = math.rsqrt %120 : vector<4x1xf32>
      %cst_93 = arith.constant dense<0.000000e+00> : vector<4x1xf32>
      %122 = tpu.matmul %110, %109, %cst_93 {dimension_numbers = #tpu.dot_dimension_numbers<[1], [0], [0], [1], [0, 0, 1, 1], [], []>} : vector<4x4xf32>, vector<4x1xf32>, vector<4x1xf32> -> vector<4x1xf32>
      %123 = arith.addf %122, %111 : vector<4x1xf32>
      %cst_94 = arith.constant dense<0.000000e+00> : vector<4x1xf32>
      %124 = tpu.matmul %112, %109, %cst_94 {dimension_numbers = #tpu.dot_dimension_numbers<[1], [0], [0], [1], [0, 0, 1, 1], [], []>} : vector<4x4xf32>, vector<4x1xf32>, vector<4x1xf32> -> vector<4x1xf32>
      %125 = arith.addf %124, %113 : vector<4x1xf32>
      %cst_95 = arith.constant 1.000000e+00 : f32
      %126 = vector.broadcast %cst_95 : f32 to vector<4x1xf32>
      %127 = arith.addf %123, %126 : vector<4x1xf32>
      %128 = arith.mulf %121, %127 : vector<4x1xf32>
      %129 = arith.mulf %114, %128 : vector<4x1xf32>
      %130 = arith.subf %125, %129 : vector<4x1xf32>
      %c1_96 = arith.constant 1 : index
      %c0_97 = arith.constant 0 : index
      %c0_98 = arith.constant 0 : index
      %131 = vector.load %arg20[%c1_96, %c0_97, %c0_98] : memref<2x4x1xf32, #tpu.memory_space<vmem>>, vector<1x4x1xf32>
      %132 = vector.shape_cast %131 : vector<1x4x1xf32> to vector<4x1xf32>
      %c2_99 = arith.constant 2 : index
      %c0_100 = arith.constant 0 : index
      %c0_101 = arith.constant 0 : index
      %133 = vector.load %arg19[%c2_99, %c0_100, %c0_101] : memref<6x4x128xf32, #tpu.memory_space<vmem>>, vector<1x4x128xf32>
      %134 = vector.shape_cast %133 : vector<1x4x128xf32> to vector<4x128xf32>
      %cst_102 = arith.constant dense<0.000000e+00> : vector<4xf32>
      %135 = vector.multi_reduction <add>, %134, %cst_102 [1] : vector<4x128xf32> to vector<4xf32>
      %136 = vector.shape_cast %135 : vector<4xf32> to vector<4x1xf32>
      %cst_103 = arith.constant 0.0069444445 : f32
      %137 = vector.broadcast %cst_103 : f32 to vector<4x1xf32>
      %138 = arith.mulf %136, %137 : vector<4x1xf32>
      %c3_104 = arith.constant 3 : index
      %c0_105 = arith.constant 0 : index
      %c0_106 = arith.constant 0 : index
      %139 = vector.load %arg19[%c3_104, %c0_105, %c0_106] : memref<6x4x128xf32, #tpu.memory_space<vmem>>, vector<1x4x128xf32>
      %140 = vector.shape_cast %139 : vector<1x4x128xf32> to vector<4x128xf32>
      %cst_107 = arith.constant dense<0.000000e+00> : vector<4xf32>
      %141 = vector.multi_reduction <add>, %140, %cst_107 [1] : vector<4x128xf32> to vector<4xf32>
      %142 = vector.shape_cast %141 : vector<4xf32> to vector<4x1xf32>
      %cst_108 = arith.constant 0.0069444445 : f32
      %143 = vector.broadcast %cst_108 : f32 to vector<4x1xf32>
      %144 = arith.mulf %142, %143 : vector<4x1xf32>
      %c5_109 = arith.constant 5 : index
      %c0_110 = arith.constant 0 : index
      %c0_111 = arith.constant 0 : index
      %145 = vector.load %arg19[%c5_109, %c0_110, %c0_111] : memref<6x4x128xf32, #tpu.memory_space<vmem>>, vector<1x4x128xf32>
      %146 = vector.shape_cast %145 : vector<1x4x128xf32> to vector<4x128xf32>
      %cst_112 = arith.constant dense<0.000000e+00> : vector<4xf32>
      %147 = vector.multi_reduction <add>, %146, %cst_112 [1] : vector<4x128xf32> to vector<4xf32>
      %148 = vector.shape_cast %147 : vector<4xf32> to vector<4x1xf32>
      %cst_113 = arith.constant 0.0069444445 : f32
      %149 = vector.broadcast %cst_113 : f32 to vector<4x1xf32>
      %150 = arith.mulf %148, %149 : vector<4x1xf32>
      %c0_114 = arith.constant 0 : index
      %c0_115 = arith.constant 0 : index
      %151 = vector.load %arg14[%c0_114, %c0_115] : memref<4x4xf32, #tpu.memory_space<vmem>>, vector<4x4xf32>
      %c0_116 = arith.constant 0 : index
      %c0_117 = arith.constant 0 : index
      %152 = vector.load %arg15[%c0_116, %c0_117] : memref<4x1xf32, #tpu.memory_space<vmem>>, vector<4x1xf32>
      %c0_118 = arith.constant 0 : index
      %c0_119 = arith.constant 0 : index
      %153 = vector.load %arg16[%c0_118, %c0_119] : memref<4x4xf32, #tpu.memory_space<vmem>>, vector<4x4xf32>
      %c0_120 = arith.constant 0 : index
      %c0_121 = arith.constant 0 : index
      %154 = vector.load %arg17[%c0_120, %c0_121] : memref<4x1xf32, #tpu.memory_space<vmem>>, vector<4x1xf32>
      %155 = arith.addf %132, %138 : vector<4x1xf32>
      %156 = arith.mulf %138, %138 : vector<4x1xf32>
      %157 = arith.subf %144, %156 : vector<4x1xf32>
      %cst_122 = arith.constant 0.000000e+00 : f32
      %158 = vector.broadcast %cst_122 : f32 to vector<4x1xf32>
      %159 = arith.maximumf %157, %158 : vector<4x1xf32>
      %cst_123 = arith.constant 9.99999974E-6 : f32
      %160 = vector.broadcast %cst_123 : f32 to vector<4x1xf32>
      %161 = arith.addf %159, %160 : vector<4x1xf32>
      %162 = math.rsqrt %161 : vector<4x1xf32>
      %cst_124 = arith.constant dense<0.000000e+00> : vector<4x1xf32>
      %163 = tpu.matmul %151, %150, %cst_124 {dimension_numbers = #tpu.dot_dimension_numbers<[1], [0], [0], [1], [0, 0, 1, 1], [], []>} : vector<4x4xf32>, vector<4x1xf32>, vector<4x1xf32> -> vector<4x1xf32>
      %164 = arith.addf %163, %152 : vector<4x1xf32>
      %cst_125 = arith.constant dense<0.000000e+00> : vector<4x1xf32>
      %165 = tpu.matmul %153, %150, %cst_125 {dimension_numbers = #tpu.dot_dimension_numbers<[1], [0], [0], [1], [0, 0, 1, 1], [], []>} : vector<4x4xf32>, vector<4x1xf32>, vector<4x1xf32> -> vector<4x1xf32>
      %166 = arith.addf %165, %154 : vector<4x1xf32>
      %cst_126 = arith.constant 1.000000e+00 : f32
      %167 = vector.broadcast %cst_126 : f32 to vector<4x1xf32>
      %168 = arith.addf %164, %167 : vector<4x1xf32>
      %169 = arith.mulf %162, %168 : vector<4x1xf32>
      %170 = arith.mulf %155, %169 : vector<4x1xf32>
      %171 = arith.subf %166, %170 : vector<4x1xf32>
      %172 = tpu.iota {dimensions = array<i32: 1>} : vector<4x4xi32>
      %cst_127 = arith.constant 0.000000e+00 : f32
      %173 = vector.broadcast %cst_127 : f32 to vector<4x4xf32>
      %c0_i32_128 = arith.constant 0 : i32
      %174 = vector.broadcast %c0_i32_128 : i32 to vector<4x4xi32>
      %175 = arith.cmpi eq, %172, %174 : vector<4x4xi32>
      %176 = vector.shape_cast %128 : vector<4x1xf32> to vector<4x1xf32>
      %177 = vector.broadcast %176 : vector<4x1xf32> to vector<4x4xf32>
      %178 = arith.select %175, %177, %173 : vector<4x4xi1>, vector<4x4xf32>
      %c1_i32_129 = arith.constant 1 : i32
      %179 = vector.broadcast %c1_i32_129 : i32 to vector<4x4xi32>
      %180 = arith.cmpi eq, %172, %179 : vector<4x4xi32>
      %181 = vector.shape_cast %130 : vector<4x1xf32> to vector<4x1xf32>
      %182 = vector.broadcast %181 : vector<4x1xf32> to vector<4x4xf32>
      %183 = arith.select %180, %182, %178 : vector<4x4xi1>, vector<4x4xf32>
      %c2_i32 = arith.constant 2 : i32
      %184 = vector.broadcast %c2_i32 : i32 to vector<4x4xi32>
      %185 = arith.cmpi eq, %172, %184 : vector<4x4xi32>
      %186 = vector.shape_cast %169 : vector<4x1xf32> to vector<4x1xf32>
      %187 = vector.broadcast %186 : vector<4x1xf32> to vector<4x4xf32>
      %188 = arith.select %185, %187, %183 : vector<4x4xi1>, vector<4x4xf32>
      %c3_i32 = arith.constant 3 : i32
      %189 = vector.broadcast %c3_i32 : i32 to vector<4x4xi32>
      %190 = arith.cmpi eq, %172, %189 : vector<4x4xi32>
      %191 = vector.shape_cast %171 : vector<4x1xf32> to vector<4x1xf32>
      %192 = vector.broadcast %191 : vector<4x1xf32> to vector<4x4xf32>
      %193 = arith.select %190, %192, %188 : vector<4x4xi1>, vector<4x4xf32>
      %c0_130 = arith.constant 0 : index
      %c0_131 = arith.constant 0 : index
      %c0_132 = arith.constant 0 : index
      %194 = vector.load %arg18[%c0_130, %c0_131, %c0_132] : memref<1x4x4xf32, #tpu.memory_space<vmem>>, vector<1x4x4xf32>
      %195 = vector.shape_cast %194 : vector<1x4x4xf32> to vector<4x4xf32>
      %196 = vector.shape_cast %193 : vector<4x4xf32> to vector<1x4x4xf32>
      tpu.vector_store %arg18[%c0_130, %c0_131, %c0_132], %196 {strides = array<i32>} : memref<1x4x4xf32, #tpu.memory_space<vmem>>, vector<1x4x4xf32>,
    } else {
    }
    return
  }
  func.func @transform_0(%arg0: i32, %arg1: i32) -> (i32, i32, i32) {
    %c0_i32 = arith.constant 0 : i32
    %c0_i32_0 = arith.constant 0 : i32
    return %arg0, %c0_i32, %arg1 : i32, i32, i32
  }
  func.func @transform_1(%arg0: i32, %arg1: i32) -> (i32, i32, i32) {
    %c0_i32 = arith.constant 0 : i32
    %c0_i32_0 = arith.constant 0 : i32
    return %arg0, %c0_i32, %arg1 : i32, i32, i32
  }
  func.func @transform_2(%arg0: i32, %arg1: i32) -> (i32, i32, i32) {
    %c0_i32 = arith.constant 0 : i32
    %c0_i32_0 = arith.constant 0 : i32
    return %arg0, %c0_i32, %arg1 : i32, i32, i32
  }
  func.func @transform_3(%arg0: i32, %arg1: i32) -> (i32, i32, i32) {
    %c0_i32 = arith.constant 0 : i32
    %c0_i32_0 = arith.constant 0 : i32
    return %arg0, %c0_i32, %arg1 : i32, i32, i32
  }
  func.func @transform_4(%arg0: i32, %arg1: i32) -> (i32, i32) {
    %c0_i32 = arith.constant 0 : i32
    %c0_i32_0 = arith.constant 0 : i32
    %c0_i32_1 = arith.constant 0 : i32
    return %c0_i32, %c0_i32_0 : i32, i32
  }
  func.func @transform_5(%arg0: i32, %arg1: i32) -> (i32, i32) {
    %c0_i32 = arith.constant 0 : i32
    %c0_i32_0 = arith.constant 0 : i32
    %c0_i32_1 = arith.constant 0 : i32
    return %c0_i32, %c0_i32_0 : i32, i32
  }
  func.func @transform_6(%arg0: i32, %arg1: i32) -> (i32, i32) {
    %c0_i32 = arith.constant 0 : i32
    %c0_i32_0 = arith.constant 0 : i32
    %c0_i32_1 = arith.constant 0 : i32
    return %c0_i32, %c0_i32_0 : i32, i32
  }
  func.func @transform_7(%arg0: i32, %arg1: i32) -> (i32, i32) {
    %c0_i32 = arith.constant 0 : i32
    %c0_i32_0 = arith.constant 0 : i32
    %c0_i32_1 = arith.constant 0 : i32
    return %c0_i32, %c0_i32_0 : i32, i32
  }
  func.func @transform_8(%arg0: i32, %arg1: i32) -> (i32, i32) {
    %c0_i32 = arith.constant 0 : i32
    %c0_i32_0 = arith.constant 0 : i32
    %c0_i32_1 = arith.constant 0 : i32
    return %c0_i32, %c0_i32_0 : i32, i32
  }
  func.func @transform_9(%arg0: i32, %arg1: i32) -> (i32, i32) {
    %c0_i32 = arith.constant 0 : i32
    %c0_i32_0 = arith.constant 0 : i32
    %c0_i32_1 = arith.constant 0 : i32
    return %c0_i32, %c0_i32_0 : i32, i32
  }
  func.func @transform_10(%arg0: i32, %arg1: i32) -> (i32, i32) {
    %c0_i32 = arith.constant 0 : i32
    %c0_i32_0 = arith.constant 0 : i32
    %c0_i32_1 = arith.constant 0 : i32
    return %c0_i32, %c0_i32_0 : i32, i32
  }
  func.func @transform_11(%arg0: i32, %arg1: i32) -> (i32, i32) {
    %c0_i32 = arith.constant 0 : i32
    %c0_i32_0 = arith.constant 0 : i32
    %c0_i32_1 = arith.constant 0 : i32
    return %c0_i32, %c0_i32_0 : i32, i32
  }
  func.func @transform_12(%arg0: i32, %arg1: i32) -> (i32, i32) {
    %c0_i32 = arith.constant 0 : i32
    %c0_i32_0 = arith.constant 0 : i32
    %c0_i32_1 = arith.constant 0 : i32
    return %c0_i32, %c0_i32_0 : i32, i32
  }
  func.func @transform_13(%arg0: i32, %arg1: i32) -> (i32, i32) {
    %c0_i32 = arith.constant 0 : i32
    %c0_i32_0 = arith.constant 0 : i32
    %c0_i32_1 = arith.constant 0 : i32
    return %c0_i32, %c0_i32_0 : i32, i32
  }
  func.func @transform_14(%arg0: i32, %arg1: i32) -> (i32, i32) {
    %c0_i32 = arith.constant 0 : i32
    %c0_i32_0 = arith.constant 0 : i32
    %c0_i32_1 = arith.constant 0 : i32
    return %c0_i32, %c0_i32_0 : i32, i32
  }
  func.func @transform_15(%arg0: i32, %arg1: i32) -> (i32, i32) {
    %c0_i32 = arith.constant 0 : i32
    %c0_i32_0 = arith.constant 0 : i32
    %c0_i32_1 = arith.constant 0 : i32
    return %c0_i32, %c0_i32_0 : i32, i32
  }
  func.func @transform_16(%arg0: i32, %arg1: i32) -> (i32, i32, i32) {
    %c0_i32 = arith.constant 0 : i32
    %c0_i32_0 = arith.constant 0 : i32
    %c0_i32_1 = arith.constant 0 : i32
    return %arg0, %c0_i32, %c0_i32_0 : i32, i32, i32
  }
}

module attributes {stable_mosaic.version = 11 : i64} {
  func.func @_freq_modulate_kernel(%arg0: i32, %arg1: i32, %arg2: memref<1x4x4xf32, #tpu.memory_space<vmem>>, %arg3: memref<1x4x128xf32, #tpu.memory_space<vmem>>, %arg4: memref<1x4x128xf32, #tpu.memory_space<vmem>>, %arg5: memref<1x4x128xf32, #tpu.memory_space<vmem>>, %arg6: memref<1x4x128xf32, #tpu.memory_space<vmem>>) attributes {dimension_semantics = [#tpu.dimension_semantics<parallel>, #tpu.dimension_semantics<parallel>], iteration_bounds = array<i64: 2, 2>, scalar_prefetch = 0 : i64, scratch_operands = 0 : i64, tpu.core_type = #tpu.core_type<tc>, window_params = [{transform_indices = @transform_0, window_bounds = array<i64: 1, 4, 4>}, {transform_indices = @transform_1, window_bounds = array<i64: 1, 4, 128>}, {transform_indices = @transform_2, window_bounds = array<i64: 1, 4, 128>}, {transform_indices = @transform_3, window_bounds = array<i64: 1, 4, 128>}, {transform_indices = @transform_4, window_bounds = array<i64: 1, 4, 128>}]} {
    %c0 = arith.constant 0 : index
    %c0_0 = arith.constant 0 : index
    %c0_1 = arith.constant 0 : index
    %0 = vector.load %arg2[%c0, %c0_0, %c0_1] : memref<1x4x4xf32, #tpu.memory_space<vmem>>, vector<1x4x4xf32>
    %1 = vector.shape_cast %0 : vector<1x4x4xf32> to vector<4x4xf32>
    %c0_2 = arith.constant 0 : index
    %c0_3 = arith.constant 0 : index
    %c0_4 = arith.constant 0 : index
    %2 = vector.load %arg3[%c0_2, %c0_3, %c0_4] : memref<1x4x128xf32, #tpu.memory_space<vmem>>, vector<1x4x128xf32>
    %3 = vector.shape_cast %2 : vector<1x4x128xf32> to vector<4x128xf32>
    %c0_5 = arith.constant 0 : index
    %c0_6 = arith.constant 0 : index
    %c0_7 = arith.constant 0 : index
    %4 = vector.load %arg4[%c0_5, %c0_6, %c0_7] : memref<1x4x128xf32, #tpu.memory_space<vmem>>, vector<1x4x128xf32>
    %5 = vector.shape_cast %4 : vector<1x4x128xf32> to vector<4x128xf32>
    %6 = vector.extract_strided_slice %1 {offsets = [0, 0], sizes = [4, 1], strides = [1, 1]} : vector<4x4xf32> to vector<4x1xf32>
    %7 = vector.broadcast %6 : vector<4x1xf32> to vector<4x128xf32>
    %8 = arith.mulf %3, %7 : vector<4x128xf32>
    %9 = vector.extract_strided_slice %1 {offsets = [0, 1], sizes = [4, 1], strides = [1, 1]} : vector<4x4xf32> to vector<4x1xf32>
    %10 = vector.broadcast %9 : vector<4x1xf32> to vector<4x128xf32>
    %11 = arith.addf %8, %10 : vector<4x128xf32>
    %12 = vector.extract_strided_slice %1 {offsets = [0, 2], sizes = [4, 1], strides = [1, 1]} : vector<4x4xf32> to vector<4x1xf32>
    %13 = vector.broadcast %12 : vector<4x1xf32> to vector<4x128xf32>
    %14 = arith.mulf %5, %13 : vector<4x128xf32>
    %15 = vector.extract_strided_slice %1 {offsets = [0, 3], sizes = [4, 1], strides = [1, 1]} : vector<4x4xf32> to vector<4x1xf32>
    %16 = vector.broadcast %15 : vector<4x1xf32> to vector<4x128xf32>
    %17 = arith.addf %14, %16 : vector<4x128xf32>
    %18 = math.cos %17 : vector<4x128xf32>
    %19 = arith.mulf %11, %18 : vector<4x128xf32>
    %c0_8 = arith.constant 0 : index
    %c0_9 = arith.constant 0 : index
    %c0_10 = arith.constant 0 : index
    %20 = vector.load %arg5[%c0_8, %c0_9, %c0_10] : memref<1x4x128xf32, #tpu.memory_space<vmem>>, vector<1x4x128xf32>
    %21 = vector.shape_cast %20 : vector<1x4x128xf32> to vector<4x128xf32>
    %22 = vector.shape_cast %19 : vector<4x128xf32> to vector<1x4x128xf32>
    tpu.vector_store %arg5[%c0_8, %c0_9, %c0_10], %22 {strides = array<i32>} : memref<1x4x128xf32, #tpu.memory_space<vmem>>, vector<1x4x128xf32>,
    %23 = math.sin %17 : vector<4x128xf32>
    %24 = arith.mulf %11, %23 : vector<4x128xf32>
    %c0_11 = arith.constant 0 : index
    %c0_12 = arith.constant 0 : index
    %c0_13 = arith.constant 0 : index
    %25 = vector.load %arg6[%c0_11, %c0_12, %c0_13] : memref<1x4x128xf32, #tpu.memory_space<vmem>>, vector<1x4x128xf32>
    %26 = vector.shape_cast %25 : vector<1x4x128xf32> to vector<4x128xf32>
    %27 = vector.shape_cast %24 : vector<4x128xf32> to vector<1x4x128xf32>
    tpu.vector_store %arg6[%c0_11, %c0_12, %c0_13], %27 {strides = array<i32>} : memref<1x4x128xf32, #tpu.memory_space<vmem>>, vector<1x4x128xf32>,
    return
  }
  func.func @transform_0(%arg0: i32, %arg1: i32) -> (i32, i32, i32) {
    %c0_i32 = arith.constant 0 : i32
    %c0_i32_0 = arith.constant 0 : i32
    %c0_i32_1 = arith.constant 0 : i32
    return %arg0, %c0_i32, %c0_i32_0 : i32, i32, i32
  }
  func.func @transform_1(%arg0: i32, %arg1: i32) -> (i32, i32, i32) {
    %c0_i32 = arith.constant 0 : i32
    %c0_i32_0 = arith.constant 0 : i32
    return %arg0, %c0_i32, %arg1 : i32, i32, i32
  }
  func.func @transform_2(%arg0: i32, %arg1: i32) -> (i32, i32, i32) {
    %c0_i32 = arith.constant 0 : i32
    %c0_i32_0 = arith.constant 0 : i32
    return %arg0, %c0_i32, %arg1 : i32, i32, i32
  }
  func.func @transform_3(%arg0: i32, %arg1: i32) -> (i32, i32, i32) {
    %c0_i32 = arith.constant 0 : i32
    %c0_i32_0 = arith.constant 0 : i32
    return %arg0, %c0_i32, %arg1 : i32, i32, i32
  }
  func.func @transform_4(%arg0: i32, %arg1: i32) -> (i32, i32, i32) {
    %c0_i32 = arith.constant 0 : i32
    %c0_i32_0 = arith.constant 0 : i32
    return %arg0, %c0_i32, %arg1 : i32, i32, i32
  }
}

module attributes {stable_mosaic.version = 11 : i64} {
  func.func @_fuse_conv_kernel(%arg0: i32, %arg1: i32, %arg2: memref<1x4x256xf32, #tpu.memory_space<vmem>>, %arg3: memref<1x4x256xf32, #tpu.memory_space<vmem>>, %arg4: memref<4x8xf32, #tpu.memory_space<vmem>>, %arg5: memref<4x1xf32, #tpu.memory_space<vmem>>, %arg6: memref<1x4x256xf32, #tpu.memory_space<vmem>>) attributes {dimension_semantics = [#tpu.dimension_semantics<parallel>, #tpu.dimension_semantics<parallel>], iteration_bounds = array<i64: 2, 1>, scalar_prefetch = 0 : i64, scratch_operands = 0 : i64, tpu.core_type = #tpu.core_type<tc>, window_params = [{transform_indices = @transform_0, window_bounds = array<i64: 1, 4, 256>}, {transform_indices = @transform_1, window_bounds = array<i64: 1, 4, 256>}, {pipeline_mode = #tpu.pipeline_mode<synchronous>, transform_indices = @transform_2, window_bounds = array<i64: 4, 8>}, {pipeline_mode = #tpu.pipeline_mode<synchronous>, transform_indices = @transform_3, window_bounds = array<i64: 4, 1>}, {transform_indices = @transform_4, window_bounds = array<i64: 1, 4, 256>}]} {
    %c0 = arith.constant 0 : index
    %c0_0 = arith.constant 0 : index
    %c0_1 = arith.constant 0 : index
    %0 = vector.load %arg2[%c0, %c0_0, %c0_1] : memref<1x4x256xf32, #tpu.memory_space<vmem>>, vector<1x4x256xf32>
    %1 = vector.shape_cast %0 : vector<1x4x256xf32> to vector<4x256xf32>
    %2 = arith.truncf %1 : vector<4x256xf32> to vector<4x256xbf16>
    %c0_2 = arith.constant 0 : index
    %c0_3 = arith.constant 0 : index
    %c0_4 = arith.constant 0 : index
    %3 = vector.load %arg3[%c0_2, %c0_3, %c0_4] : memref<1x4x256xf32, #tpu.memory_space<vmem>>, vector<1x4x256xf32>
    %4 = vector.shape_cast %3 : vector<1x4x256xf32> to vector<4x256xf32>
    %5 = arith.truncf %4 : vector<4x256xf32> to vector<4x256xbf16>
    %c0_5 = arith.constant 0 : index
    %c0_6 = arith.constant 0 : index
    %6 = vector.load %arg4[%c0_5, %c0_6] : memref<4x8xf32, #tpu.memory_space<vmem>>, vector<4x8xf32>
    %7 = arith.truncf %6 : vector<4x8xf32> to vector<4x8xbf16>
    %8 = vector.extract_strided_slice %7 {offsets = [0, 0], sizes = [4, 4], strides = [1, 1]} : vector<4x8xbf16> to vector<4x4xbf16>
    %cst = arith.constant dense<0.000000e+00> : vector<4x256xf32>
    %9 = tpu.matmul %8, %2, %cst {dimension_numbers = #tpu.dot_dimension_numbers<[1], [0], [0], [1], [0, 0, 1, 1], [], []>} : vector<4x4xbf16>, vector<4x256xbf16>, vector<4x256xf32> -> vector<4x256xf32>
    %10 = vector.extract_strided_slice %7 {offsets = [0, 4], sizes = [4, 4], strides = [1, 1]} : vector<4x8xbf16> to vector<4x4xbf16>
    %cst_7 = arith.constant dense<0.000000e+00> : vector<4x256xf32>
    %11 = tpu.matmul %10, %5, %cst_7 {dimension_numbers = #tpu.dot_dimension_numbers<[1], [0], [0], [1], [0, 0, 1, 1], [], []>} : vector<4x4xbf16>, vector<4x256xbf16>, vector<4x256xf32> -> vector<4x256xf32>
    %12 = arith.addf %9, %11 : vector<4x256xf32>
    %c0_8 = arith.constant 0 : index
    %c0_9 = arith.constant 0 : index
    %13 = vector.load %arg5[%c0_8, %c0_9] : memref<4x1xf32, #tpu.memory_space<vmem>>, vector<4x1xf32>
    %14 = vector.broadcast %13 : vector<4x1xf32> to vector<4x256xf32>
    %15 = arith.addf %12, %14 : vector<4x256xf32>
    %c0_10 = arith.constant 0 : index
    %c0_11 = arith.constant 0 : index
    %c0_12 = arith.constant 0 : index
    %16 = vector.load %arg6[%c0_10, %c0_11, %c0_12] : memref<1x4x256xf32, #tpu.memory_space<vmem>>, vector<1x4x256xf32>
    %17 = vector.shape_cast %16 : vector<1x4x256xf32> to vector<4x256xf32>
    %18 = vector.shape_cast %15 : vector<4x256xf32> to vector<1x4x256xf32>
    tpu.vector_store %arg6[%c0_10, %c0_11, %c0_12], %18 {strides = array<i32>} : memref<1x4x256xf32, #tpu.memory_space<vmem>>, vector<1x4x256xf32>,
    return
  }
  func.func @transform_0(%arg0: i32, %arg1: i32) -> (i32, i32, i32) {
    %c0_i32 = arith.constant 0 : i32
    %c0_i32_0 = arith.constant 0 : i32
    return %arg0, %c0_i32, %arg1 : i32, i32, i32
  }
  func.func @transform_1(%arg0: i32, %arg1: i32) -> (i32, i32, i32) {
    %c0_i32 = arith.constant 0 : i32
    %c0_i32_0 = arith.constant 0 : i32
    return %arg0, %c0_i32, %arg1 : i32, i32, i32
  }
  func.func @transform_2(%arg0: i32, %arg1: i32) -> (i32, i32) {
    %c0_i32 = arith.constant 0 : i32
    %c0_i32_0 = arith.constant 0 : i32
    %c0_i32_1 = arith.constant 0 : i32
    return %c0_i32, %c0_i32_0 : i32, i32
  }
  func.func @transform_3(%arg0: i32, %arg1: i32) -> (i32, i32) {
    %c0_i32 = arith.constant 0 : i32
    %c0_i32_0 = arith.constant 0 : i32
    %c0_i32_1 = arith.constant 0 : i32
    return %c0_i32, %c0_i32_0 : i32, i32
  }
  func.func @transform_4(%arg0: i32, %arg1: i32) -> (i32, i32, i32) {
    %c0_i32 = arith.constant 0 : i32
    %c0_i32_0 = arith.constant 0 : i32
    return %arg0, %c0_i32, %arg1 : i32, i32, i32
  }
}

</mosaic_0001>

<llo_original>
// kernel: sfm_block_forward.4
$region0: #{sfm_block_forward.4}
  #allocation0 [shape = 'u32[]', space=smem, size = 0x4, offset = 0x4, fixed_abs, tag = 'smem constant byte address 0x4 - core index']
  #allocation1 [shape = 'u32[72,128]{1,0:T(1,128)}', space=vmem, size = 0x9000, scoped, tag = 'internal scratch']
  %s0 = inlined_call_operand.vmem [shape: f32[2,4,4], index: 0, kind: input, shape index: {}]
  %s1 = inlined_call_operand.vmem [shape: f32[2,4,144], index: 1, kind: input, shape index: {}]
  %s2 = inlined_call_operand.vmem [shape: f32[2,4,144], index: 2, kind: input, shape index: {}]
  %s3 = inlined_call_operand.vmem [shape: f32[2,4,144], index: 3, kind: output, shape index: {0}]
  %s4 = inlined_call_operand.vmem [shape: f32[2,4,144], index: 4, kind: output, shape index: {1}]
  %5 = xla_tuple %s3, %s4
  %s6 = sld [smem:[#allocation0]]
  $region53: #{sfm_block_forward.4} parent=0
    _
  %s8 = ssub.s32 1, %s6
  %s9 = scalar_select 0, %s8, %s6
  loop: start=0, step=1, limit=6
  $region2: #{sfm_block_forward.4} parent=0 // loop_pre_header
    _
  $region3: #{sfm_block_forward.4} parent=0 // loop_header
    %s11 = sphi 0, %s15
    %p12 = scmp.ge.s32.totalorder %s11, 6
    %s18 = sphi 0, %s30
    %s19 = sphi 0, %s26
    %s20 = sphi 0, %s18
    %s21 = sphi 0, %s19
    %s22 = sphi 0, %s20
    %s23 = sphi 0, %s21
    %s33 = sphi 0, %s35
    %s36 = sphi 0, %s33
    %s37 = sphi 0, %s36
    %s53 = sphi 0, %s37
    %s61 = sphi 0, %s63
    %s64 = sphi 0, %s61
    %s65 = sphi 0, %s64
    %s81 = sphi 0, %s65
    %s89 = sphi 0, %s91
    %s92 = sphi 0, %s89
    %s93 = sphi 0, %s92
    %s109 = sphi 0, %s93
    %s117 = sphi 0, %s119
    %s120 = sphi 0, %s117
    %s121 = sphi 0, %s120
    %s137 = sphi 0, %s121
    %s145 = sphi 0, %s147
    %s148 = sphi 0, %s145
    %s149 = sphi 0, %s148
    %s165 = sphi 0, %s149
  $region4: #{sfm_block_forward.4} parent=0 // loop_header_branch
    %14 = sbr.rel (%p12) target = $region8
  $region5: #{sfm_block_forward.4} parent=0 // loop_body
    %s16 = ssub.s32 %s11, 1
    %s17 = ssub.s32 %s11, 2
    %s24 = sadd.s32 1, %s19
    %p25 = scmp.ge.s32.totalorder %s24, 2
    %s26 = scalar_select %p25, 0, %s24
    %s27 = sadd.s32 1, %s18
    %s28 = scalar_select %p25, %s27, %s18
    %p29 = scmp.ge.s32.totalorder %s28, 2
    %s30 = scalar_select %p29, 0, %s28
    %s31 = ssub.s32 %s18, %s30
    %p32 = scmp.eq.s32.totalorder %s31, 0
    %s34 = sadd.s32 %s33, 1
    %s35 = scalar_select %p32, %s33, %s34
    %p38 = pneg %p32
    %p39 = scmp.eq.s32.totalorder %s11, 3
    %p40 = por %p38, %p39
    %p41 = scmp.ne.s32.totalorder %s33, %s36
    %p42 = scmp.eq.s32.totalorder %s11, 0
    %p43 = por %p41, %p42
    %p44 = scmp.ne.s32.totalorder %s33, %s36
    %p45 = scmp.eq.s32.totalorder %s16, 3
    %p46 = por %p44, %p45
    %p47 = scmp.ne.s32.totalorder %s36, %s37
    %p48 = scmp.eq.s32.totalorder %s16, 0
    %p49 = por %p47, %p48
    %p50 = scmp.ne.s32.totalorder %s36, %s37
    %p51 = scmp.eq.s32.totalorder %s17, 3
    %p52 = por %p50, %p51
    %p54 = scmp.ne.s32.totalorder %s37, %s53
    %p55 = scmp.eq.s32.totalorder %s17, 0
    %p56 = por %p54, %p55
    %s57 = ssub.s32 %s18, %s30
    %s58 = ssub.s32 %s19, %s26
    %s59 = sor.u32 %s57, %s58
    %p60 = scmp.eq.s32.totalorder %s59, 0
    %s62 = sadd.s32 %s61, 1
    %s63 = scalar_select %p60, %s61, %s62
    %p66 = pneg %p60
    %p67 = scmp.eq.s32.totalorder %s11, 3
    %p68 = por %p66, %p67
    %p69 = scmp.ne.s32.totalorder %s61, %s64
    %p70 = scmp.eq.s32.totalorder %s11, 0
    %p71 = por %p69, %p70
    %p72 = scmp.ne.s32.totalorder %s61, %s64
    %p73 = scmp.eq.s32.totalorder %s16, 3
    %p74 = por %p72, %p73
    %p75 = scmp.ne.s32.totalorder %s64, %s65
    %p76 = scmp.eq.s32.totalorder %s16, 0
    %p77 = por %p75, %p76
    %p78 = scmp.ne.s32.totalorder %s64, %s65
    %p79 = scmp.eq.s32.totalorder %s17, 3
    %p80 = por %p78, %p79
    %p82 = scmp.ne.s32.totalorder %s65, %s81
    %p83 = scmp.eq.s32.totalorder %s17, 0
    %p84 = por %p82, %p83
    %s85 = ssub.s32 %s18, %s30
    %s86 = ssub.s32 %s19, %s26
    %s87 = sor.u32 %s85, %s86
    %p88 = scmp.eq.s32.totalorder %s87, 0
    %s90 = sadd.s32 %s89, 1
    %s91 = scalar_select %p88, %s89, %s90
    %p94 = pneg %p88
    %p95 = scmp.eq.s32.totalorder %s11, 3
    %p96 = por %p94, %p95
    %p97 = scmp.ne.s32.totalorder %s89, %s92
    %p98 = scmp.eq.s32.totalorder %s11, 0
    %p99 = por %p97, %p98
    %p100 = scmp.ne.s32.totalorder %s89, %s92
    %p101 = scmp.eq.s32.totalorder %s16, 3
    %p102 = por %p100, %p101
    %p103 = scmp.ne.s32.totalorder %s92, %s93
    %p104 = scmp.eq.s32.totalorder %s16, 0
    %p105 = por %p103, %p104
    %p106 = scmp.ne.s32.totalorder %s92, %s93
    %p107 = scmp.eq.s32.totalorder %s17, 3
    %p108 = por %p106, %p107
    %p110 = scmp.ne.s32.totalorder %s93, %s109
    %p111 = scmp.eq.s32.totalorder %s17, 0
    %p112 = por %p110, %p111
    %s113 = ssub.s32 %s18, %s30
    %s114 = ssub.s32 %s19, %s26
    %s115 = sor.u32 %s113, %s114
    %p116 = scmp.eq.s32.totalorder %s115, 0
    %s118 = sadd.s32 %s117, 1
    %s119 = scalar_select %p116, %s117, %s118
    %p122 = pneg %p116
    %p123 = scmp.eq.s32.totalorder %s11, 3
    %p124 = por %p122, %p123
    %p125 = scmp.ne.s32.totalorder %s117, %s120
    %p126 = scmp.eq.s32.totalorder %s11, 0
    %p127 = por %p125, %p126
    %p128 = scmp.ne.s32.totalorder %s117, %s120
    %p129 = scmp.eq.s32.totalorder %s16, 3
    %p130 = por %p128, %p129
    %p131 = scmp.ne.s32.totalorder %s120, %s121
    %p132 = scmp.eq.s32.totalorder %s16, 0
    %p133 = por %p131, %p132
    %p134 = scmp.ne.s32.totalorder %s120, %s121
    %p135 = scmp.eq.s32.totalorder %s17, 3
    %p136 = por %p134, %p135
    %p138 = scmp.ne.s32.totalorder %s121, %s137
    %p139 = scmp.eq.s32.totalorder %s17, 0
    %p140 = por %p138, %p139
    %s141 = ssub.s32 %s18, %s30
    %s142 = ssub.s32 %s19, %s26
    %s143 = sor.u32 %s141, %s142
    %p144 = scmp.eq.s32.totalorder %s143, 0
    %s146 = sadd.s32 %s145, 1
    %s147 = scalar_select %p144, %s145, %s146
    %p150 = pneg %p144
    %p151 = scmp.eq.s32.totalorder %s11, 3
    %p152 = por %p150, %p151
    %p153 = scmp.ne.s32.totalorder %s145, %s148
    %p154 = scmp.eq.s32.totalorder %s11, 0
    %p155 = por %p153, %p154
    %p156 = scmp.ne.s32.totalorder %s145, %s148
    %p157 = scmp.eq.s32.totalorder %s16, 3
    %p158 = por %p156, %p157
    %p159 = scmp.ne.s32.totalorder %s148, %s149
    %p160 = scmp.eq.s32.totalorder %s16, 0
    %p161 = por %p159, %p160
    %p162 = scmp.ne.s32.totalorder %s148, %s149
    %p163 = scmp.eq.s32.totalorder %s17, 3
    %p164 = por %p162, %p163
    %p166 = scmp.ne.s32.totalorder %s149, %s165
    %p167 = scmp.eq.s32.totalorder %s17, 0
    %p168 = por %p166, %p167
    %p169 = scmp.le.s32.totalorder 1, %s11
    %p170 = scmp.lt.s32.totalorder %s11, 5
    %p171 = pnand %p169, %p170
    %p172 = pneg %p171
    // Predicated region
    $region9: #{sfm_block_forward.4} parent=5 // pred_check
      _
    $region10: #{sfm_block_forward.4} parent=5 // pred_check_branch
      %174 = sbr.rel (%p171) target = $region12
    $region11: #{sfm_block_forward.4} parent=5 // pred_region
      %s175 = ssub.s32 %s11, 1
    $region12: #{sfm_block_forward.4} parent=5 // pred_fallthru
      _
    %p176 = scmp.lt.s32.totalorder %s11, 4
    // Predicated region
    $region13: #{sfm_block_forward.4} parent=5 // pred_check
      %p177 = pneg %p176
    $region14: #{sfm_block_forward.4} parent=5 // pred_check_branch
      %179 = sbr.rel (%p177) target = $region16
    $region15: #{sfm_block_forward.4} parent=5 // pred_region
      // Predicated region
      $region17: #{sfm_block_forward.4} parent=15 // pred_check
        %p180 = pneg %p43
      $region18: #{sfm_block_forward.4} parent=15 // pred_check_branch
        %182 = sbr.rel (%p180) target = $region20
      $region19: #{sfm_block_forward.4} parent=15 // pred_region
        %p183 = scmp.lt.s32.totalorder %s18, 1
        %s184 = scalar_select %p183, %s18, 1
        %s185 = smul.addr %s184, 4
        %s186 = scalar_lea.vmem %s0, %s185
      $region20: #{sfm_block_forward.4} parent=15 // pred_fallthru
        _
      // Predicated region
      $region21: #{sfm_block_forward.4} parent=15 // pred_check
        %p187 = pneg %p71
      $region22: #{sfm_block_forward.4} parent=15 // pred_check_branch
        %189 = sbr.rel (%p187) target = $region24
      $region23: #{sfm_block_forward.4} parent=15 // pred_region
        %p190 = scmp.lt.s32.totalorder %s18, 1
        %s191 = scalar_select %p190, %s18, 1
        %p192 = scmp.lt.s32.totalorder %s19, 1
        %s193 = scalar_select %p192, %s19, 1
        %s194 = smul.addr %s191, 2
        %s195 = sadd.s32 %s193, %s194
        %s196 = smul.addr %s195, 4
        %s197 = scalar_lea.vmem %s1, %s196
      $region24: #{sfm_block_forward.4} parent=15 // pred_fallthru
        _
      // Predicated region
      $region25: #{sfm_block_forward.4} parent=15 // pred_check
        %p198 = pneg %p99
      $region26: #{sfm_block_forward.4} parent=15 // pred_check_branch
        %200 = sbr.rel (%p198) target = $region28
      $region27: #{sfm_block_forward.4} parent=15 // pred_region
        %p201 = scmp.lt.s32.totalorder %s18, 1
        %s202 = scalar_select %p201, %s18, 1
        %p203 = scmp.lt.s32.totalorder %s19, 1
        %s204 = scalar_select %p203, %s19, 1
        %s205 = smul.addr %s202, 2
        %s206 = sadd.s32 %s204, %s205
        %s207 = smul.addr %s206, 4
        %s208 = scalar_lea.vmem %s2, %s207
      $region28: #{sfm_block_forward.4} parent=15 // pred_fallthru
        _
    $region16: #{sfm_block_forward.4} parent=5 // pred_fallthru
      _
    %p209 = scmp.le.s32.totalorder 1, %s11
    %p210 = scmp.lt.s32.totalorder %s11, 5
    %p211 = pnand %p209, %p210
    %p212 = pneg %p211
    // Predicated region
    $region29: #{sfm_block_forward.4} parent=5 // pred_check
      _
    $region30: #{sfm_block_forward.4} parent=5 // pred_check_branch
      %214 = sbr.rel (%p211) target = $region32
    $region31: #{sfm_block_forward.4} parent=5 // pred_region
      %s215 = ssub.s32 %s11, 1
      %p216 = scmp.lt.s32.totalorder %s20, 1
      %s217 = scalar_select %p216, %s20, 1
      %s218 = smul.addr %s217, 4
      %s219 = scalar_lea.vmem %s0, %s218
      %p220 = pneg %p49
      %p221 = pneg %p46
      %p222 = scmp.lt.s32.totalorder %s20, 1
      %s223 = scalar_select %p222, %s20, 1
      %p224 = scmp.lt.s32.totalorder %s21, 1
      %s225 = scalar_select %p224, %s21, 1
      %s226 = smul.addr %s223, 2
      %s227 = sadd.s32 %s225, %s226
      %s228 = smul.addr %s227, 4
      %s229 = scalar_lea.vmem %s1, %s228
      %p230 = pneg %p77
      %p231 = pneg %p74
      %p232 = scmp.lt.s32.totalorder %s20, 1
      %s233 = scalar_select %p232, %s20, 1
      %p234 = scmp.lt.s32.totalorder %s21, 1
      %s235 = scalar_select %p234, %s21, 1
      %s236 = smul.addr %s233, 2
      %s237 = sadd.s32 %s235, %s236
      %s238 = smul.addr %s237, 4
      %s239 = scalar_lea.vmem %s2, %s238
      %p240 = pneg %p105
      %p241 = pneg %p102
      %p242 = pneg %p133
      %p243 = pneg %p130
      %p244 = scmp.lt.s32.totalorder %s20, 1
      %s245 = scalar_select %p244, %s20, 1
      %p246 = scmp.lt.s32.totalorder %s21, 1
      %s247 = scalar_select %p246, %s21, 1
      %s248 = smul.addr %s245, 2
      %s249 = sadd.s32 %s247, %s248
      %s250 = smul.addr %s249, 4
      %s251 = scalar_lea.vmem %s3, %s250
      %p252 = pneg %p161
      %p253 = pneg %p158
      %p254 = scmp.lt.s32.totalorder %s20, 1
      %s255 = scalar_select %p254, %s20, 1
      %p256 = scmp.lt.s32.totalorder %s21, 1
      %s257 = scalar_select %p256, %s21, 1
      %s258 = smul.addr %s255, 2
      %s259 = sadd.s32 %s257, %s258
      %s260 = smul.addr %s259, 4
      %s261 = scalar_lea.vmem %s4, %s260
      %p262 = scmp.lt.s32.totalorder %s20, 1
      %s263 = scalar_select %p262, %s20, 1
      %s264 = smul.addr %s263, 4
      %s265 = scalar_lea.vmem %s0, %s264
      %p266 = scmp.lt.s32.totalorder %s20, 1
      %s267 = scalar_select %p266, %s20, 1
      %p268 = scmp.lt.s32.totalorder %s21, 1
      %s269 = scalar_select %p268, %s21, 1
      %s270 = smul.addr %s267, 2
      %s271 = sadd.s32 %s269, %s270
      %s272 = smul.addr %s271, 4
      %s273 = scalar_lea.vmem %s1, %s272
      %p274 = scmp.lt.s32.totalorder %s20, 1
      %s275 = scalar_select %p274, %s20, 1
      %p276 = scmp.lt.s32.totalorder %s21, 1
      %s277 = scalar_select %p276, %s21, 1
      %s278 = smul.addr %s275, 2
      %s279 = sadd.s32 %s277, %s278
      %s280 = smul.addr %s279, 4
      %s281 = scalar_lea.vmem %s2, %s280
      %p282 = scmp.lt.s32.totalorder %s20, 1
      %s283 = scalar_select %p282, %s20, 1
      %p284 = scmp.lt.s32.totalorder %s21, 1
      %s285 = scalar_select %p284, %s21, 1
      %s286 = smul.addr %s283, 2
      %s287 = sadd.s32 %s285, %s286
      %s288 = smul.addr %s287, 4
      %s289 = scalar_lea.vmem %s3, %s288
      %p290 = scmp.lt.s32.totalorder %s20, 1
      %s291 = scalar_select %p290, %s20, 1
      %p292 = scmp.lt.s32.totalorder %s21, 1
      %s293 = scalar_select %p292, %s21, 1
      %s294 = smul.addr %s291, 2
      %s295 = sadd.s32 %s293, %s294
      %s296 = smul.addr %s295, 4
      %s297 = scalar_lea.vmem %s4, %s296
      %v298 = vld [vmem:[%s265] sm:$0xf]
      %v299 = vld [vmem:[%s273] sm:$0xf]
      %v300 = vld [vmem:[%s281] sm:$0xf]
      %302 = vset.pattern.permute.xlu0 0
      %303 = vperm.xlu0 %302, %v298
      %v304 = vpop.permute.xlu0 %303
      %v306 = vmul.f32 %v299, %v304
      %307 = vset.pattern.permute.xlu0 1
      %308 = vperm.xlu0 %307, %v298
      %v309 = vpop.permute.xlu0 %308
      %v311 = vadd.f32 %v306, %v309
      %312 = vset.pattern.permute.xlu0 2
      %313 = vperm.xlu0 %312, %v298
      %v314 = vpop.permute.xlu0 %313
      %v316 = vmul.f32 %v300, %v314
      %317 = vset.pattern.permute.xlu0 3
      %318 = vperm.xlu0 %317, %v298
      %v319 = vpop.permute.xlu0 %318
      %v321 = vadd.f32 %v316, %v319
      %v322 = vand.u32 2147483647, %v321
      %vm323 = vcmp.le.f32.partialorder %v322, 0.7853982
      %vm324 = vcmp.lt.s32.totalorder %v321, 0
      %v325 = vand.u32 %v321, 2139095040
      %v326 = vshrl.u32 %v325, 23
      %v327 = vsub.s32 %v326, 127
      %v328 = vand.u32 2147483647, %v321
      %v329 = vand.u32 %v328, 8388607
      %v330 = vor.u32 %v329, 8388608
      %v331 = vsub.s32 0, %v330
      %v332 = vadd.s32 %v327, 1
      %vm333 = vcmp.gt.s32.totalorder %v332, 0
      %v334 = vsel %vm333, %v332, 0
      %v335 = vshrl.u32 %v334, 5
      %v336 = vand.u32 %v334, 31
      %v337 = vsub.s32 32, %v336
      %v338 = vshrl.u32 683565275, %v337
      %v339 = vshll.u32 683565275, %v336
      %v340 = vshrl.u32 2475754826, %v337
      %v341 = vor.u32 %v339, %v340
      %v342 = vshll.u32 2475754826, %v336
      %v343 = vshrl.u32 2131351028, %v337
      %v344 = vor.u32 %v342, %v343
      %v345 = vshll.u32 2131351028, %v336
      %v346 = vshrl.u32 2102212464, %v337
      %v347 = vor.u32 %v345, %v346
      %v348 = vshll.u32 2102212464, %v336
      %v349 = vshrl.u32 920167782, %v337
      %v350 = vor.u32 %v348, %v349
      %v351 = vshll.u32 920167782, %v336
      %v352 = vshrl.u32 1326507024, %v337
      %v353 = vor.u32 %v351, %v352
      %vm354 = vcmp.lt.s32.totalorder %v335, 1
      %vm355 = vcmp.lt.s32.totalorder %v335, 2
      %vm356 = vcmp.lt.s32.totalorder %v335, 3
      %vm357 = vcmp.lt.s32.totalorder %v335, 4
      %v358 = vsel %vm354, %v338, %v341
      %v359 = vsel %vm357, %v347, 2102212464
      %v360 = vsel %vm356, %v344, %v359
      %v361 = vsel %vm355, %v358, %v360
      %v362 = vsel %vm354, %v341, %v344
      %v363 = vsel %vm357, %v350, 920167782
      %v364 = vsel %vm356, %v347, %v363
      %v365 = vsel %vm355, %v362, %v364
      %v366 = vsel %vm354, %v344, %v347
      %v367 = vsel %vm357, %v353, 1326507024
      %v368 = vsel %vm356, %v350, %v367
      %v369 = vsel %vm355, %v366, %v368
      %v370 = vshll.u32 %v330, 8
      %v371 = vand.u32 %v370, 65535
      %v372 = vshrl.u32 %v370, 16
      %v373 = vand.u32 %v369, 65535
      %v374 = vshrl.u32 %v369, 16
      %v375 = vmul.u32 %v371, %v373
      %v376 = vmul.u32 %v371, %v374
      %v377 = vmul.u32 %v372, %v373
      %v378 = vmul.u32 %v372, %v374
      %v379 = vshll.u32 %v376, 16
      %v380 = vshrl.u32 %v376, 16
      %v381 = vshll.u32 %v377, 16
      %v382 = vshrl.u32 %v377, 16
      %vm383 = vc.u32 %v375, %v379
      %v384 = vsel %vm383, 1, 0
      %v385 = vadd.s32 %v375, %v379
      %v386 = vadd.s32 %v378, %v384
      %vm387 = vc.u32 %v385, %v381
      %v388 = vsel %vm387, 1, 0
      %v389 = vadd.s32 %v385, %v381
      %v390 = vadd.s32 %v386, %v388
      %v391 = vadd.s32 %v390, %v380
      %v392 = vadd.s32 %v391, %v382
      %v393 = vand.u32 %v370, 65535
      %v394 = vshrl.u32 %v370, 16
      %v395 = vand.u32 %v365, 65535
      %v396 = vshrl.u32 %v365, 16
      %v397 = vmul.u32 %v393, %v395
      %v398 = vmul.u32 %v393, %v396
      %v399 = vmul.u32 %v394, %v395
      %v400 = vmul.u32 %v394, %v396
      %v401 = vshll.u32 %v398, 16
      %v402 = vshrl.u32 %v398, 16
      %v403 = vshll.u32 %v399, 16
      %v404 = vshrl.u32 %v399, 16
      %vm405 = vc.u32 %v397, %v401
      %v406 = vsel %vm405, 1, 0
      %v407 = vadd.s32 %v397, %v401
      %v408 = vadd.s32 %v400, %v406
      %vm409 = vc.u32 %v407, %v403
      %v410 = vsel %vm409, 1, 0
      %v411 = vadd.s32 %v407, %v403
      %v412 = vadd.s32 %v408, %v410
      %v413 = vadd.s32 %v412, %v402
      %v414 = vadd.s32 %v413, %v404
      %v415 = vmul.u32 %v370, %v361
      %v416 = vadd.s32 %v392, %v411
      %vm417 = vc.u32 %v392, %v411
      %v418 = vadd.s32 %v414, 1
      %v419 = vsel %vm417, %v418, %v414
      %v420 = vadd.s32 %v415, %v419
      %v421 = vadd.s32 %v420, 536870912
      %v422 = vshrl.u32 %v421, 30
      %v423 = vshll.u32 %v422, 30
      %v424 = vsub.s32 %v420, %v423
      %vm425 = vcmp.lt.s32.totalorder %v424, 0
      %v426 = vsub.s32 0, %v424
      %v427 = vsel %vm425, %v426, %v424
      %v428 = vclz %v427
      %v429 = vsub.s32 %v428, 2
      %vm430 = vcmp.gt.s32.totalorder 0, %v429
      %v431 = vsel %vm430, 0, %v429
      %v432 = vsub.s32 32, %v431
      %v433 = vshll.u32 %v424, %v431
      %v434 = vshrl.u32 %v416, %v432
      %v435 = vor.u32 %v433, %v434
      %v436 = vsub.s32 4294967266, %v431
      %v437 = vadd.s32 %v436, 127
      %v438 = vshll.u32 %v437, 23
      %v439 = vor.u32 4788187, %v438
      %v440 = vand.u32 2147483647, %v439
      %v442 = vcvt.s32.f32 %v435
      %v443 = vmul.f32 %v442, %v440
      %v444 = vxor.u32 %v443, 2147483648
      %v445 = vsel %vm324, %v444, %v443
      %v446 = vsub.s32 4, %v422
      %v447 = vsel %vm324, %v446, %v422
      %v448 = vsel %vm323, %v321, %v445
      %v449 = vsel %vm323, 0, %v447
      %v450 = vmul.f32 %v448, %v448
      %v451 = vmul.f32 %v450, -0.001358992
      %v452 = vadd.f32 %v451, 0.041655596
      %v453 = vmul.f32 %v450, %v452
      %v454 = vadd.f32 %v453, -0.4999988
      %v455 = vmul.f32 %v450, %v454
      %v456 = vadd.f32 1.0, %v455
      %v457 = vmul.f32 %v448, %v448
      %v458 = vmul.f32 %v457, -0.00019511016
      %v459 = vadd.f32 %v458, 0.008332121
      %v460 = vmul.f32 %v457, %v459
      %v461 = vadd.f32 %v460, -0.16666654
      %v462 = vmul.f32 %v457, %v461
      %v463 = vadd.f32 %v462, 1.0
      %v464 = vmul.f32 %v463, %v448
      %vm465 = vweird.f32 %v321
      %v466 = vand.u32 %v449, 3
      %vm467 = vcmp.lt.s32.totalorder %v466, 2
      %vm468 = vcmp.eq.s32.totalorder %v466, 0
      %v469 = vxor.u32 %v464, 2147483648
      %v470 = vsel %vm468, %v456, %v469
      %vm471 = vcmp.eq.s32.totalorder %v466, 2
      %v472 = vxor.u32 %v456, 2147483648
      %v473 = vsel %vm471, %v472, %v464
      %v474 = vsel %vm467, %v470, %v473
      %v475 = vsel %vm465, nan, %v474
      %v476 = vmul.f32 %v311, %v475
      %477 = vst [vmem:[%s289] sm:$0xf] %v476
      %v478 = vand.u32 2147483647, %v321
      %vm479 = vcmp.le.f32.partialorder %v478, 0.7853982
      %vm480 = vcmp.lt.s32.totalorder %v321, 0
      %v481 = vand.u32 %v321, 2139095040
      %v482 = vshrl.u32 %v481, 23
      %v483 = vsub.s32 %v482, 127
      %v484 = vand.u32 2147483647, %v321
      %v485 = vand.u32 %v484, 8388607
      %v486 = vor.u32 %v485, 8388608
      %v487 = vsub.s32 0, %v486
      %v488 = vadd.s32 %v483, 1
      %vm489 = vcmp.gt.s32.totalorder %v488, 0
      %v490 = vsel %vm489, %v488, 0
      %v491 = vshrl.u32 %v490, 5
      %v492 = vand.u32 %v490, 31
      %v493 = vsub.s32 32, %v492
      %v494 = vshrl.u32 683565275, %v493
      %v495 = vshll.u32 683565275, %v492
      %v496 = vshrl.u32 2475754826, %v493
      %v497 = vor.u32 %v495, %v496
      %v498 = vshll.u32 2475754826, %v492
      %v499 = vshrl.u32 2131351028, %v493
      %v500 = vor.u32 %v498, %v499
      %v501 = vshll.u32 2131351028, %v492
      %v502 = vshrl.u32 2102212464, %v493
      %v503 = vor.u32 %v501, %v502
      %v504 = vshll.u32 2102212464, %v492
      %v505 = vshrl.u32 920167782, %v493
      %v506 = vor.u32 %v504, %v505
      %v507 = vshll.u32 920167782, %v492
      %v508 = vshrl.u32 1326507024, %v493
      %v509 = vor.u32 %v507, %v508
      %vm510 = vcmp.lt.s32.totalorder %v491, 1
      %vm511 = vcmp.lt.s32.totalorder %v491, 2
      %vm512 = vcmp.lt.s32.totalorder %v491, 3
      %vm513 = vcmp.lt.s32.totalorder %v491, 4
      %v514 = vsel %vm510, %v494, %v497
      %v515 = vsel %vm513, %v503, 2102212464
      %v516 = vsel %vm512, %v500, %v515
      %v517 = vsel %vm511, %v514, %v516
      %v518 = vsel %vm510, %v497, %v500
      %v519 = vsel %vm513, %v506, 920167782
      %v520 = vsel %vm512, %v503, %v519
      %v521 = vsel %vm511, %v518, %v520
      %v522 = vsel %vm510, %v500, %v503
      %v523 = vsel %vm513, %v509, 1326507024
      %v524 = vsel %vm512, %v506, %v523
      %v525 = vsel %vm511, %v522, %v524
      %v526 = vshll.u32 %v486, 8
      %v527 = vand.u32 %v526, 65535
      %v528 = vshrl.u32 %v526, 16
      %v529 = vand.u32 %v525, 65535
      %v530 = vshrl.u32 %v525, 16
      %v531 = vmul.u32 %v527, %v529
      %v532 = vmul.u32 %v527, %v530
      %v533 = vmul.u32 %v528, %v529
      %v534 = vmul.u32 %v528, %v530
      %v535 = vshll.u32 %v532, 16
      %v536 = vshrl.u32 %v532, 16
      %v537 = vshll.u32 %v533, 16
      %v538 = vshrl.u32 %v533, 16
      %vm539 = vc.u32 %v531, %v535
      %v540 = vsel %vm539, 1, 0
      %v541 = vadd.s32 %v531, %v535
      %v542 = vadd.s32 %v534, %v540
      %vm543 = vc.u32 %v541, %v537
      %v544 = vsel %vm543, 1, 0
      %v545 = vadd.s32 %v541, %v537
      %v546 = vadd.s32 %v542, %v544
      %v547 = vadd.s32 %v546, %v536
      %v548 = vadd.s32 %v547, %v538
      %v549 = vand.u32 %v526, 65535
      %v550 = vshrl.u32 %v526, 16
      %v551 = vand.u32 %v521, 65535
      %v552 = vshrl.u32 %v521, 16
      %v553 = vmul.u32 %v549, %v551
      %v554 = vmul.u32 %v549, %v552
      %v555 = vmul.u32 %v550, %v551
      %v556 = vmul.u32 %v550, %v552
      %v557 = vshll.u32 %v554, 16
      %v558 = vshrl.u32 %v554, 16
      %v559 = vshll.u32 %v555, 16
      %v560 = vshrl.u32 %v555, 16
      %vm561 = vc.u32 %v553, %v557
      %v562 = vsel %vm561, 1, 0
      %v563 = vadd.s32 %v553, %v557
      %v564 = vadd.s32 %v556, %v562
      %vm565 = vc.u32 %v563, %v559
      %v566 = vsel %vm565, 1, 0
      %v567 = vadd.s32 %v563, %v559
      %v568 = vadd.s32 %v564, %v566
      %v569 = vadd.s32 %v568, %v558
      %v570 = vadd.s32 %v569, %v560
      %v571 = vmul.u32 %v526, %v517
      %v572 = vadd.s32 %v548, %v567
      %vm573 = vc.u32 %v548, %v567
      %v574 = vadd.s32 %v570, 1
      %v575 = vsel %vm573, %v574, %v570
      %v576 = vadd.s32 %v571, %v575
      %v577 = vadd.s32 %v576, 536870912
      %v578 = vshrl.u32 %v577, 30
      %v579 = vshll.u32 %v578, 30
      %v580 = vsub.s32 %v576, %v579
      %vm581 = vcmp.lt.s32.totalorder %v580, 0
      %v582 = vsub.s32 0, %v580
      %v583 = vsel %vm581, %v582, %v580
      %v584 = vclz %v583
      %v585 = vsub.s32 %v584, 2
      %vm586 = vcmp.gt.s32.totalorder 0, %v585
      %v587 = vsel %vm586, 0, %v585
      %v588 = vsub.s32 32, %v587
      %v589 = vshll.u32 %v580, %v587
      %v590 = vshrl.u32 %v572, %v588
      %v591 = vor.u32 %v589, %v590
      %v592 = vsub.s32 4294967266, %v587
      %v593 = vadd.s32 %v592, 127
      %v594 = vshll.u32 %v593, 23
      %v595 = vor.u32 4788187, %v594
      %v596 = vand.u32 2147483647, %v595
      %v598 = vcvt.s32.f32 %v591
      %v599 = vmul.f32 %v598, %v596
      %v600 = vxor.u32 %v599, 2147483648
      %v601 = vsel %vm480, %v600, %v599
      %v602 = vsub.s32 4, %v578
      %v603 = vsel %vm480, %v602, %v578
      %v604 = vsel %vm479, %v321, %v601
      %v605 = vsel %vm479, 0, %v603
      %v606 = vmul.f32 %v604, %v604
      %v607 = vmul.f32 %v606, -0.001358992
      %v608 = vadd.f32 %v607, 0.041655596
      %v609 = vmul.f32 %v606, %v608
      %v610 = vadd.f32 %v609, -0.4999988
      %v611 = vmul.f32 %v606, %v610
      %v612 = vadd.f32 1.0, %v611
      %v613 = vmul.f32 %v604, %v604
      %v614 = vmul.f32 %v613, -0.00019511016
      %v615 = vadd.f32 %v614, 0.008332121
      %v616 = vmul.f32 %v613, %v615
      %v617 = vadd.f32 %v616, -0.16666654
      %v618 = vmul.f32 %v613, %v617
      %v619 = vadd.f32 %v618, 1.0
      %v620 = vmul.f32 %v619, %v604
      %vm621 = vweird.f32 %v321
      %v622 = vadd.s32 %v605, 3
      %v623 = vand.u32 %v622, 3
      %vm624 = vcmp.lt.s32.totalorder %v623, 2
      %vm625 = vcmp.eq.s32.totalorder %v623, 0
      %v626 = vxor.u32 %v620, 2147483648
      %v627 = vsel %vm625, %v612, %v626
      %vm628 = vcmp.eq.s32.totalorder %v623, 2
      %v629 = vxor.u32 %v612, 2147483648
      %v630 = vsel %vm628, %v629, %v620
      %v631 = vsel %vm624, %v627, %v630
      %v632 = vsel %vm621, nan, %v631
      %v633 = vmul.f32 %v311, %v632
      %634 = vst [vmem:[%s297] sm:$0xf] %v633
      %p635 = scmp.lt.s32.totalorder %s20, 1
      %s636 = scalar_select %p635, %s20, 1
      %p637 = scmp.lt.s32.totalorder %s21, 1
      %s638 = scalar_select %p637, %s21, 1
      %s639 = smul.addr %s636, 2
      %s640 = sadd.s32 %s638, %s639
      %s641 = smul.addr %s640, 4
      %s642 = scalar_lea.vmem %s3, %s641
      %p643 = scmp.lt.s32.totalorder %s20, 1
      %s644 = scalar_select %p643, %s20, 1
      %p645 = scmp.lt.s32.totalorder %s21, 1
      %s646 = scalar_select %p645, %s21, 1
      %s647 = smul.addr %s644, 2
      %s648 = sadd.s32 %s646, %s647
      %s649 = smul.addr %s648, 4
      %s650 = scalar_lea.vmem %s4, %s649
      // Predicated region
      $region33: #{sfm_block_forward.4} parent=31 // pred_check
        %p651 = pneg %p130
      $region34: #{sfm_block_forward.4} parent=31 // pred_check_branch
        %653 = sbr.rel (%p651) target = $region36
      $region35: #{sfm_block_forward.4} parent=31 // pred_region
        _
      $region36: #{sfm_block_forward.4} parent=31 // pred_fallthru
        _
      // Predicated region
      $region37: #{sfm_block_forward.4} parent=31 // pred_check
        %p654 = pneg %p158
      $region38: #{sfm_block_forward.4} parent=31 // pred_check_branch
        %656 = sbr.rel (%p654) target = $region40
      $region39: #{sfm_block_forward.4} parent=31 // pred_region
        _
      $region40: #{sfm_block_forward.4} parent=31 // pred_fallthru
        _
    $region32: #{sfm_block_forward.4} parent=5 // pred_fallthru
      _
    %p657 = scmp.le.s32.totalorder 2, %s11
    // Predicated region
    $region41: #{sfm_block_forward.4} parent=5 // pred_check
      %p658 = pneg %p657
    $region42: #{sfm_block_forward.4} parent=5 // pred_check_branch
      %660 = sbr.rel (%p658) target = $region44
    $region43: #{sfm_block_forward.4} parent=5 // pred_region
      %s661 = ssub.s32 %s11, 2
      // Predicated region
      $region45: #{sfm_block_forward.4} parent=43 // pred_check
        %p662 = pneg %p136
      $region46: #{sfm_block_forward.4} parent=43 // pred_check_branch
        %664 = sbr.rel (%p662) target = $region48
      $region47: #{sfm_block_forward.4} parent=43 // pred_region
        %p665 = scmp.lt.s32.totalorder %s22, 1
        %s666 = scalar_select %p665, %s22, 1
        %p667 = scmp.lt.s32.totalorder %s23, 1
        %s668 = scalar_select %p667, %s23, 1
        %s669 = smul.addr %s666, 2
        %s670 = sadd.s32 %s668, %s669
        %s671 = smul.addr %s670, 4
        %s672 = scalar_lea.vmem %s3, %s671
      $region48: #{sfm_block_forward.4} parent=43 // pred_fallthru
        _
      // Predicated region
      $region49: #{sfm_block_forward.4} parent=43 // pred_check
        %p673 = pneg %p164
      $region50: #{sfm_block_forward.4} parent=43 // pred_check_branch
        %675 = sbr.rel (%p673) target = $region52
      $region51: #{sfm_block_forward.4} parent=43 // pred_region
        %p676 = scmp.lt.s32.totalorder %s22, 1
        %s677 = scalar_select %p676, %s22, 1
        %p678 = scmp.lt.s32.totalorder %s23, 1
        %s679 = scalar_select %p678, %s23, 1
        %s680 = smul.addr %s677, 2
        %s681 = sadd.s32 %s679, %s680
        %s682 = smul.addr %s681, 4
        %s683 = scalar_lea.vmem %s4, %s682
      $region52: #{sfm_block_forward.4} parent=43 // pred_fallthru
        _
    $region44: #{sfm_block_forward.4} parent=5 // pred_fallthru
      _
  $region6: #{sfm_block_forward.4} parent=0 // loop_footer
    %s15 = sadd.s32 1, %s11
  $region7: #{sfm_block_forward.4} parent=0 // loop_footer_branch
    %10 = sbr.rel target = $region3
  $region8: #{sfm_block_forward.4} parent=0 // loop_exit
    _

// kernel: reverse.1
$region0: #{reverse.1}
  #allocation0 [shape = 's32[1]{0}', space=sflag, size = 0x4, scoped, tag = 'scoped memory for reverse.1']
  %s0 = inlined_call_operand.vmem [shape: f32[2,4,16,7], index: 0, kind: input, shape index: {}]
  %s1 = inlined_call_operand.vmem [shape: f32[2,4,16,7], index: 1, kind: output, shape index: {}]
  %s2 = scalar_lea.vmem %s0, 24
  %v3 = vld [vmem:[%s2] sm:$0xf]
  %4 = vst [vmem:[%s1] sm:$0xf] %v3
  %s5 = scalar_lea.vmem %s0, 52
  %v6 = vld [vmem:[%s5] sm:$0xf]
  %s7 = scalar_lea.vmem %s1, 28
  %8 = vst [vmem:[%s7] sm:$0xf] %v6
  %s9 = scalar_lea.vmem %s0, 20
  %v10 = vld [vmem:[%s9] sm:$0xf]
  %s11 = scalar_lea.vmem %s1, 4
  %12 = vst [vmem:[%s11] sm:$0xf] %v10
  %s13 = scalar_lea.vmem %s0, 48
  %v14 = vld [vmem:[%s13] sm:$0xf]
  %s15 = scalar_lea.vmem %s1, 32
  %16 = vst [vmem:[%s15] sm:$0xf] %v14
  %s17 = scalar_lea.vmem %s0, 16
  %v18 = vld [vmem:[%s17] sm:$0xf]
  %s19 = scalar_lea.vmem %s1, 8
  %20 = vst [vmem:[%s19] sm:$0xf] %v18
  %s21 = scalar_lea.vmem %s0, 44
  %v22 = vld [vmem:[%s21] sm:$0xf]
  %s23 = scalar_lea.vmem %s1, 36
  %24 = vst [vmem:[%s23] sm:$0xf] %v22
  %s25 = scalar_lea.vmem %s0, 12
  %v26 = vld [vmem:[%s25] sm:$0xf]
  %s27 = scalar_lea.vmem %s1, 12
  %28 = vst [vmem:[%s27] sm:$0xf] %v26
  %s29 = scalar_lea.vmem %s0, 40
  %v30 = vld [vmem:[%s29] sm:$0xf]
  %s31 = scalar_lea.vmem %s1, 40
  %32 = vst [vmem:[%s31] sm:$0xf] %v30
  %s33 = scalar_lea.vmem %s0, 8
  %v34 = vld [vmem:[%s33] sm:$0xf]
  %s35 = scalar_lea.vmem %s1, 16
  %36 = vst [vmem:[%s35] sm:$0xf] %v34
  %s37 = scalar_lea.vmem %s0, 36
  %v38 = vld [vmem:[%s37] sm:$0xf]
  %s39 = scalar_lea.vmem %s1, 44
  %40 = vst [vmem:[%s39] sm:$0xf] %v38
  %s41 = scalar_lea.vmem %s0, 4
  %v42 = vld [vmem:[%s41] sm:$0xf]
  %s43 = scalar_lea.vmem %s1, 20
  %44 = vst [vmem:[%s43] sm:$0xf] %v42
  %s45 = scalar_lea.vmem %s0, 32
  %v46 = vld [vmem:[%s45] sm:$0xf]
  %s47 = scalar_lea.vmem %s1, 48
  %48 = vst [vmem:[%s47] sm:$0xf] %v46
  %v49 = vld [vmem:[%s0] sm:$0xf]
  %s50 = scalar_lea.vmem %s1, 24
  %51 = vst [vmem:[%s50] sm:$0xf] %v49
  %s52 = scalar_lea.vmem %s0, 28
  %v53 = vld [vmem:[%s52] sm:$0xf]
  %s54 = scalar_lea.vmem %s1, 52
  %55 = vst [vmem:[%s54] sm:$0xf] %v53

// kernel: sfm_block_forward.3
$region0: #{sfm_block_forward.3}
  #allocation0 [shape = 'u32[]', space=smem, size = 0x4, offset = 0x4, fixed_abs, tag = 'smem constant byte address 0x4 - core index']
  #allocation1 [shape = 'u32[72,128]{1,0:T(1,128)}', space=vmem, size = 0x9000, scoped, tag = 'internal scratch']
  #allocation2 [shape = 'f32[6,4,128]{2,1,0:T(4,128)}', space=vmem, size = 0x3000, scoped, tag = 'scratch operand']
  #allocation3 [shape = 'f32[2,4,1]{2,1,0:T(4,128)}', space=vmem, size = 0x1000, scoped, tag = 'scratch operand']
  %s0 = inlined_call_operand.vmem [shape: f32[2,4,144], index: 0, kind: input, shape index: {}]
  %s1 = inlined_call_operand.vmem [shape: f32[2,4,144], index: 1, kind: input, shape index: {}]
  %s2 = inlined_call_operand.vmem [shape: bf16[2,4,144], index: 2, kind: input, shape index: {}]
  %s3 = inlined_call_operand.vmem [shape: bf16[2,4,144], index: 3, kind: input, shape index: {}]
  %s4 = inlined_call_operand.vmem [shape: f32[4,4], index: 4, kind: input, shape index: {}]
  %s5 = inlined_call_operand.vmem [shape: f32[4,1], index: 5, kind: input, shape index: {}]
  %s6 = inlined_call_operand.vmem [shape: f32[4,4], index: 6, kind: input, shape index: {}]
  %s7 = inlined_call_operand.vmem [shape: f32[4,1], index: 7, kind: input, shape index: {}]
  %s8 = inlined_call_operand.vmem [shape: f32[4,4], index: 8, kind: input, shape index: {}]
  %s9 = inlined_call_operand.vmem [shape: f32[4,1], index: 9, kind: input, shape index: {}]
  %s10 = inlined_call_operand.vmem [shape: f32[4,4], index: 10, kind: input, shape index: {}]
  %s11 = inlined_call_operand.vmem [shape: f32[4,1], index: 11, kind: input, shape index: {}]
  %s12 = inlined_call_operand.vmem [shape: f32[4,4], index: 12, kind: input, shape index: {}]
  %s13 = inlined_call_operand.vmem [shape: f32[4,1], index: 13, kind: input, shape index: {}]
  %s14 = inlined_call_operand.vmem [shape: f32[4,4], index: 14, kind: input, shape index: {}]
  %s15 = inlined_call_operand.vmem [shape: f32[4,1], index: 15, kind: input, shape index: {}]
  %s16 = inlined_call_operand.vmem [shape: f32[2,4,4], index: 16, kind: output, shape index: {}]
  %s17 = sld [smem:[#allocation0]]
  $region105: #{sfm_block_forward.3} parent=0
    _
  %s19 = ssub.s32 1, %s17
  %s20 = scalar_select 0, %s19, %s17
  loop: start=0, step=1, limit=6
  $region2: #{sfm_block_forward.3} parent=0 // loop_pre_header
    _
  $region3: #{sfm_block_forward.3} parent=0 // loop_header
    %s22 = sphi 0, %s26
    %p23 = scmp.ge.s32.totalorder %s22, 6
    %s29 = sphi 0, %s41
    %s30 = sphi 0, %s37
    %s31 = sphi 0, %s29
    %s32 = sphi 0, %s30
    %s33 = sphi 0, %s31
    %s34 = sphi 0, %s32
    %s46 = sphi 0, %s48
    %s49 = sphi 0, %s46
    %s50 = sphi 0, %s49
    %s66 = sphi 0, %s50
    %s74 = sphi 0, %s76
    %s77 = sphi 0, %s74
    %s78 = sphi 0, %s77
    %s94 = sphi 0, %s78
    %s102 = sphi 0, %s104
    %s105 = sphi 0, %s102
    %s106 = sphi 0, %s105
    %s122 = sphi 0, %s106
    %s130 = sphi 0, %s132
    %s133 = sphi 0, %s130
    %s134 = sphi 0, %s133
    %s150 = sphi 0, %s134
    %s154 = sphi 0, %s154
    %s156 = sphi 0, %s154
    %s157 = sphi 0, %s156
    %s171 = sphi 0, %s157
    %s175 = sphi 0, %s175
    %s177 = sphi 0, %s175
    %s178 = sphi 0, %s177
    %s192 = sphi 0, %s178
    %s196 = sphi 0, %s196
    %s198 = sphi 0, %s196
    %s199 = sphi 0, %s198
    %s213 = sphi 0, %s199
    %s217 = sphi 0, %s217
    %s219 = sphi 0, %s217
    %s220 = sphi 0, %s219
    %s234 = sphi 0, %s220
    %s238 = sphi 0, %s238
    %s240 = sphi 0, %s238
    %s241 = sphi 0, %s240
    %s255 = sphi 0, %s241
    %s259 = sphi 0, %s259
    %s261 = sphi 0, %s259
    %s262 = sphi 0, %s261
    %s276 = sphi 0, %s262
    %s280 = sphi 0, %s280
    %s282 = sphi 0, %s280
    %s283 = sphi 0, %s282
    %s297 = sphi 0, %s283
    %s301 = sphi 0, %s301
    %s303 = sphi 0, %s301
    %s304 = sphi 0, %s303
    %s318 = sphi 0, %s304
    %s322 = sphi 0, %s322
    %s324 = sphi 0, %s322
    %s325 = sphi 0, %s324
    %s339 = sphi 0, %s325
    %s343 = sphi 0, %s343
    %s345 = sphi 0, %s343
    %s346 = sphi 0, %s345
    %s360 = sphi 0, %s346
    %s364 = sphi 0, %s364
    %s366 = sphi 0, %s364
    %s367 = sphi 0, %s366
    %s381 = sphi 0, %s367
    %s385 = sphi 0, %s385
    %s387 = sphi 0, %s385
    %s388 = sphi 0, %s387
    %s402 = sphi 0, %s388
    %s408 = sphi 0, %s410
    %s411 = sphi 0, %s408
    %s412 = sphi 0, %s411
    %s428 = sphi 0, %s412
  $region4: #{sfm_block_forward.3} parent=0 // loop_header_branch
    %25 = sbr.rel (%p23) target = $region8
  $region5: #{sfm_block_forward.3} parent=0 // loop_body
    %s27 = ssub.s32 %s22, 1
    %s28 = ssub.s32 %s22, 2
    %s35 = sadd.s32 1, %s30
    %p36 = scmp.ge.s32.totalorder %s35, 2
    %s37 = scalar_select %p36, 0, %s35
    %s38 = sadd.s32 1, %s29
    %s39 = scalar_select %p36, %s38, %s29
    %p40 = scmp.ge.s32.totalorder %s39, 2
    %s41 = scalar_select %p40, 0, %s39
    %s42 = ssub.s32 %s29, %s41
    %s43 = ssub.s32 %s30, %s37
    %s44 = sor.u32 %s42, %s43
    %p45 = scmp.eq.s32.totalorder %s44, 0
    %s47 = sadd.s32 %s46, 1
    %s48 = scalar_select %p45, %s46, %s47
    %p51 = pneg %p45
    %p52 = scmp.eq.s32.totalorder %s22, 3
    %p53 = por %p51, %p52
    %p54 = scmp.ne.s32.totalorder %s46, %s49
    %p55 = scmp.eq.s32.totalorder %s22, 0
    %p56 = por %p54, %p55
    %p57 = scmp.ne.s32.totalorder %s46, %s49
    %p58 = scmp.eq.s32.totalorder %s27, 3
    %p59 = por %p57, %p58
    %p60 = scmp.ne.s32.totalorder %s49, %s50
    %p61 = scmp.eq.s32.totalorder %s27, 0
    %p62 = por %p60, %p61
    %p63 = scmp.ne.s32.totalorder %s49, %s50
    %p64 = scmp.eq.s32.totalorder %s28, 3
    %p65 = por %p63, %p64
    %p67 = scmp.ne.s32.totalorder %s50, %s66
    %p68 = scmp.eq.s32.totalorder %s28, 0
    %p69 = por %p67, %p68
    %s70 = ssub.s32 %s29, %s41
    %s71 = ssub.s32 %s30, %s37
    %s72 = sor.u32 %s70, %s71
    %p73 = scmp.eq.s32.totalorder %s72, 0
    %s75 = sadd.s32 %s74, 1
    %s76 = scalar_select %p73, %s74, %s75
    %p79 = pneg %p73
    %p80 = scmp.eq.s32.totalorder %s22, 3
    %p81 = por %p79, %p80
    %p82 = scmp.ne.s32.totalorder %s74, %s77
    %p83 = scmp.eq.s32.totalorder %s22, 0
    %p84 = por %p82, %p83
    %p85 = scmp.ne.s32.totalorder %s74, %s77
    %p86 = scmp.eq.s32.totalorder %s27, 3
    %p87 = por %p85, %p86
    %p88 = scmp.ne.s32.totalorder %s77, %s78
    %p89 = scmp.eq.s32.totalorder %s27, 0
    %p90 = por %p88, %p89
    %p91 = scmp.ne.s32.totalorder %s77, %s78
    %p92 = scmp.eq.s32.totalorder %s28, 3
    %p93 = por %p91, %p92
    %p95 = scmp.ne.s32.totalorder %s78, %s94
    %p96 = scmp.eq.s32.totalorder %s28, 0
    %p97 = por %p95, %p96
    %s98 = ssub.s32 %s29, %s41
    %s99 = ssub.s32 %s30, %s37
    %s100 = sor.u32 %s98, %s99
    %p101 = scmp.eq.s32.totalorder %s100, 0
    %s103 = sadd.s32 %s102, 1
    %s104 = scalar_select %p101, %s102, %s103
    %p107 = pneg %p101
    %p108 = scmp.eq.s32.totalorder %s22, 3
    %p109 = por %p107, %p108
    %p110 = scmp.ne.s32.totalorder %s102, %s105
    %p111 = scmp.eq.s32.totalorder %s22, 0
    %p112 = por %p110, %p111
    %p113 = scmp.ne.s32.totalorder %s102, %s105
    %p114 = scmp.eq.s32.totalorder %s27, 3
    %p115 = por %p113, %p114
    %p116 = scmp.ne.s32.totalorder %s105, %s106
    %p117 = scmp.eq.s32.totalorder %s27, 0
    %p118 = por %p116, %p117
    %p119 = scmp.ne.s32.totalorder %s105, %s106
    %p120 = scmp.eq.s32.totalorder %s28, 3
    %p121 = por %p119, %p120
    %p123 = scmp.ne.s32.totalorder %s106, %s122
    %p124 = scmp.eq.s32.totalorder %s28, 0
    %p125 = por %p123, %p124
    %s126 = ssub.s32 %s29, %s41
    %s127 = ssub.s32 %s30, %s37
    %s128 = sor.u32 %s126, %s127
    %p129 = scmp.eq.s32.totalorder %s128, 0
    %s131 = sadd.s32 %s130, 1
    %s132 = scalar_select %p129, %s130, %s131
    %p135 = pneg %p129
    %p136 = scmp.eq.s32.totalorder %s22, 3
    %p137 = por %p135, %p136
    %p138 = scmp.ne.s32.totalorder %s130, %s133
    %p139 = scmp.eq.s32.totalorder %s22, 0
    %p140 = por %p138, %p139
    %p141 = scmp.ne.s32.totalorder %s130, %s133
    %p142 = scmp.eq.s32.totalorder %s27, 3
    %p143 = por %p141, %p142
    %p144 = scmp.ne.s32.totalorder %s133, %s134
    %p145 = scmp.eq.s32.totalorder %s27, 0
    %p146 = por %p144, %p145
    %p147 = scmp.ne.s32.totalorder %s133, %s134
    %p148 = scmp.eq.s32.totalorder %s28, 3
    %p149 = por %p147, %p148
    %p151 = scmp.ne.s32.totalorder %s134, %s150
    %p152 = scmp.eq.s32.totalorder %s28, 0
    %p153 = por %p151, %p152
    %s155 = sadd.s32 %s154, 1
    %p158 = scmp.eq.s32.totalorder %s22, 3
    %p159 = scmp.ne.s32.totalorder %s154, %s156
    %p160 = scmp.eq.s32.totalorder %s22, 0
    %p161 = por %p159, %p160
    %p162 = scmp.ne.s32.totalorder %s154, %s156
    %p163 = scmp.eq.s32.totalorder %s27, 3
    %p164 = por %p162, %p163
    %p165 = scmp.ne.s32.totalorder %s156, %s157
    %p166 = scmp.eq.s32.totalorder %s27, 0
    %p167 = por %p165, %p166
    %p168 = scmp.ne.s32.totalorder %s156, %s157
    %p169 = scmp.eq.s32.totalorder %s28, 3
    %p170 = por %p168, %p169
    %p172 = scmp.ne.s32.totalorder %s157, %s171
    %p173 = scmp.eq.s32.totalorder %s28, 0
    %p174 = por %p172, %p173
    %s176 = sadd.s32 %s175, 1
    %p179 = scmp.eq.s32.totalorder %s22, 3
    %p180 = scmp.ne.s32.totalorder %s175, %s177
    %p181 = scmp.eq.s32.totalorder %s22, 0
    %p182 = por %p180, %p181
    %p183 = scmp.ne.s32.totalorder %s175, %s177
    %p184 = scmp.eq.s32.totalorder %s27, 3
    %p185 = por %p183, %p184
    %p186 = scmp.ne.s32.totalorder %s177, %s178
    %p187 = scmp.eq.s32.totalorder %s27, 0
    %p188 = por %p186, %p187
    %p189 = scmp.ne.s32.totalorder %s177, %s178
    %p190 = scmp.eq.s32.totalorder %s28, 3
    %p191 = por %p189, %p190
    %p193 = scmp.ne.s32.totalorder %s178, %s192
    %p194 = scmp.eq.s32.totalorder %s28, 0
    %p195 = por %p193, %p194
    %s197 = sadd.s32 %s196, 1
    %p200 = scmp.eq.s32.totalorder %s22, 3
    %p201 = scmp.ne.s32.totalorder %s196, %s198
    %p202 = scmp.eq.s32.totalorder %s22, 0
    %p203 = por %p201, %p202
    %p204 = scmp.ne.s32.totalorder %s196, %s198
    %p205 = scmp.eq.s32.totalorder %s27, 3
    %p206 = por %p204, %p205
    %p207 = scmp.ne.s32.totalorder %s198, %s199
    %p208 = scmp.eq.s32.totalorder %s27, 0
    %p209 = por %p207, %p208
    %p210 = scmp.ne.s32.totalorder %s198, %s199
    %p211 = scmp.eq.s32.totalorder %s28, 3
    %p212 = por %p210, %p211
    %p214 = scmp.ne.s32.totalorder %s199, %s213
    %p215 = scmp.eq.s32.totalorder %s28, 0
    %p216 = por %p214, %p215
    %s218 = sadd.s32 %s217, 1
    %p221 = scmp.eq.s32.totalorder %s22, 3
    %p222 = scmp.ne.s32.totalorder %s217, %s219
    %p223 = scmp.eq.s32.totalorder %s22, 0
    %p224 = por %p222, %p223
    %p225 = scmp.ne.s32.totalorder %s217, %s219
    %p226 = scmp.eq.s32.totalorder %s27, 3
    %p227 = por %p225, %p226
    %p228 = scmp.ne.s32.totalorder %s219, %s220
    %p229 = scmp.eq.s32.totalorder %s27, 0
    %p230 = por %p228, %p229
    %p231 = scmp.ne.s32.totalorder %s219, %s220
    %p232 = scmp.eq.s32.totalorder %s28, 3
    %p233 = por %p231, %p232
    %p235 = scmp.ne.s32.totalorder %s220, %s234
    %p236 = scmp.eq.s32.totalorder %s28, 0
    %p237 = por %p235, %p236
    %s239 = sadd.s32 %s238, 1
    %p242 = scmp.eq.s32.totalorder %s22, 3
    %p243 = scmp.ne.s32.totalorder %s238, %s240
    %p244 = scmp.eq.s32.totalorder %s22, 0
    %p245 = por %p243, %p244
    %p246 = scmp.ne.s32.totalorder %s238, %s240
    %p247 = scmp.eq.s32.totalorder %s27, 3
    %p248 = por %p246, %p247
    %p249 = scmp.ne.s32.totalorder %s240, %s241
    %p250 = scmp.eq.s32.totalorder %s27, 0
    %p251 = por %p249, %p250
    %p252 = scmp.ne.s32.totalorder %s240, %s241
    %p253 = scmp.eq.s32.totalorder %s28, 3
    %p254 = por %p252, %p253
    %p256 = scmp.ne.s32.totalorder %s241, %s255
    %p257 = scmp.eq.s32.totalorder %s28, 0
    %p258 = por %p256, %p257
    %s260 = sadd.s32 %s259, 1
    %p263 = scmp.eq.s32.totalorder %s22, 3
    %p264 = scmp.ne.s32.totalorder %s259, %s261
    %p265 = scmp.eq.s32.totalorder %s22, 0
    %p266 = por %p264, %p265
    %p267 = scmp.ne.s32.totalorder %s259, %s261
    %p268 = scmp.eq.s32.totalorder %s27, 3
    %p269 = por %p267, %p268
    %p270 = scmp.ne.s32.totalorder %s261, %s262
    %p271 = scmp.eq.s32.totalorder %s27, 0
    %p272 = por %p270, %p271
    %p273 = scmp.ne.s32.totalorder %s261, %s262
    %p274 = scmp.eq.s32.totalorder %s28, 3
    %p275 = por %p273, %p274
    %p277 = scmp.ne.s32.totalorder %s262, %s276
    %p278 = scmp.eq.s32.totalorder %s28, 0
    %p279 = por %p277, %p278
    %s281 = sadd.s32 %s280, 1
    %p284 = scmp.eq.s32.totalorder %s22, 3
    %p285 = scmp.ne.s32.totalorder %s280, %s282
    %p286 = scmp.eq.s32.totalorder %s22, 0
    %p287 = por %p285, %p286
    %p288 = scmp.ne.s32.totalorder %s280, %s282
    %p289 = scmp.eq.s32.totalorder %s27, 3
    %p290 = por %p288, %p289
    %p291 = scmp.ne.s32.totalorder %s282, %s283
    %p292 = scmp.eq.s32.totalorder %s27, 0
    %p293 = por %p291, %p292
    %p294 = scmp.ne.s32.totalorder %s282, %s283
    %p295 = scmp.eq.s32.totalorder %s28, 3
    %p296 = por %p294, %p295
    %p298 = scmp.ne.s32.totalorder %s283, %s297
    %p299 = scmp.eq.s32.totalorder %s28, 0
    %p300 = por %p298, %p299
    %s302 = sadd.s32 %s301, 1
    %p305 = scmp.eq.s32.totalorder %s22, 3
    %p306 = scmp.ne.s32.totalorder %s301, %s303
    %p307 = scmp.eq.s32.totalorder %s22, 0
    %p308 = por %p306, %p307
    %p309 = scmp.ne.s32.totalorder %s301, %s303
    %p310 = scmp.eq.s32.totalorder %s27, 3
    %p311 = por %p309, %p310
    %p312 = scmp.ne.s32.totalorder %s303, %s304
    %p313 = scmp.eq.s32.totalorder %s27, 0
    %p314 = por %p312, %p313
    %p315 = scmp.ne.s32.totalorder %s303, %s304
    %p316 = scmp.eq.s32.totalorder %s28, 3
    %p317 = por %p315, %p316
    %p319 = scmp.ne.s32.totalorder %s304, %s318
    %p320 = scmp.eq.s32.totalorder %s28, 0
    %p321 = por %p319, %p320
    %s323 = sadd.s32 %s322, 1
    %p326 = scmp.eq.s32.totalorder %s22, 3
    %p327 = scmp.ne.s32.totalorder %s322, %s324
    %p328 = scmp.eq.s32.totalorder %s22, 0
    %p329 = por %p327, %p328
    %p330 = scmp.ne.s32.totalorder %s322, %s324
    %p331 = scmp.eq.s32.totalorder %s27, 3
    %p332 = por %p330, %p331
    %p333 = scmp.ne.s32.totalorder %s324, %s325
    %p334 = scmp.eq.s32.totalorder %s27, 0
    %p335 = por %p333, %p334
    %p336 = scmp.ne.s32.totalorder %s324, %s325
    %p337 = scmp.eq.s32.totalorder %s28, 3
    %p338 = por %p336, %p337
    %p340 = scmp.ne.s32.totalorder %s325, %s339
    %p341 = scmp.eq.s32.totalorder %s28, 0
    %p342 = por %p340, %p341
    %s344 = sadd.s32 %s343, 1
    %p347 = scmp.eq.s32.totalorder %s22, 3
    %p348 = scmp.ne.s32.totalorder %s343, %s345
    %p349 = scmp.eq.s32.totalorder %s22, 0
    %p350 = por %p348, %p349
    %p351 = scmp.ne.s32.totalorder %s343, %s345
    %p352 = scmp.eq.s32.totalorder %s27, 3
    %p353 = por %p351, %p352
    %p354 = scmp.ne.s32.totalorder %s345, %s346
    %p355 = scmp.eq.s32.totalorder %s27, 0
    %p356 = por %p354, %p355
    %p357 = scmp.ne.s32.totalorder %s345, %s346
    %p358 = scmp.eq.s32.totalorder %s28, 3
    %p359 = por %p357, %p358
    %p361 = scmp.ne.s32.totalorder %s346, %s360
    %p362 = scmp.eq.s32.totalorder %s28, 0
    %p363 = por %p361, %p362
    %s365 = sadd.s32 %s364, 1
    %p368 = scmp.eq.s32.totalorder %s22, 3
    %p369 = scmp.ne.s32.totalorder %s364, %s366
    %p370 = scmp.eq.s32.totalorder %s22, 0
    %p371 = por %p369, %p370
    %p372 = scmp.ne.s32.totalorder %s364, %s366
    %p373 = scmp.eq.s32.totalorder %s27, 3
    %p374 = por %p372, %p373
    %p375 = scmp.ne.s32.totalorder %s366, %s367
    %p376 = scmp.eq.s32.totalorder %s27, 0
    %p377 = por %p375, %p376
    %p378 = scmp.ne.s32.totalorder %s366, %s367
    %p379 = scmp.eq.s32.totalorder %s28, 3
    %p380 = por %p378, %p379
    %p382 = scmp.ne.s32.totalorder %s367, %s381
    %p383 = scmp.eq.s32.totalorder %s28, 0
    %p384 = por %p382, %p383
    %s386 = sadd.s32 %s385, 1
    %p389 = scmp.eq.s32.totalorder %s22, 3
    %p390 = scmp.ne.s32.totalorder %s385, %s387
    %p391 = scmp.eq.s32.totalorder %s22, 0
    %p392 = por %p390, %p391
    %p393 = scmp.ne.s32.totalorder %s385, %s387
    %p394 = scmp.eq.s32.totalorder %s27, 3
    %p395 = por %p393, %p394
    %p396 = scmp.ne.s32.totalorder %s387, %s388
    %p397 = scmp.eq.s32.totalorder %s27, 0
    %p398 = por %p396, %p397
    %p399 = scmp.ne.s32.totalorder %s387, %s388
    %p400 = scmp.eq.s32.totalorder %s28, 3
    %p401 = por %p399, %p400
    %p403 = scmp.ne.s32.totalorder %s388, %s402
    %p404 = scmp.eq.s32.totalorder %s28, 0
    %p405 = por %p403, %p404
    %s406 = ssub.s32 %s29, %s41
    %p407 = scmp.eq.s32.totalorder %s406, 0
    %s409 = sadd.s32 %s408, 1
    %s410 = scalar_select %p407, %s408, %s409
    %p413 = pneg %p407
    %p414 = scmp.eq.s32.totalorder %s22, 3
    %p415 = por %p413, %p414
    %p416 = scmp.ne.s32.totalorder %s408, %s411
    %p417 = scmp.eq.s32.totalorder %s22, 0
    %p418 = por %p416, %p417
    %p419 = scmp.ne.s32.totalorder %s408, %s411
    %p420 = scmp.eq.s32.totalorder %s27, 3
    %p421 = por %p419, %p420
    %p422 = scmp.ne.s32.totalorder %s411, %s412
    %p423 = scmp.eq.s32.totalorder %s27, 0
    %p424 = por %p422, %p423
    %p425 = scmp.ne.s32.totalorder %s411, %s412
    %p426 = scmp.eq.s32.totalorder %s28, 3
    %p427 = por %p425, %p426
    %p429 = scmp.ne.s32.totalorder %s412, %s428
    %p430 = scmp.eq.s32.totalorder %s28, 0
    %p431 = por %p429, %p430
    %p432 = scmp.le.s32.totalorder 1, %s22
    %p433 = scmp.lt.s32.totalorder %s22, 5
    %p434 = pnand %p432, %p433
    %p435 = pneg %p434
    // Predicated region
    $region9: #{sfm_block_forward.3} parent=5 // pred_check
      _
    $region10: #{sfm_block_forward.3} parent=5 // pred_check_branch
      %437 = sbr.rel (%p434) target = $region12
    $region11: #{sfm_block_forward.3} parent=5 // pred_region
      %s438 = ssub.s32 %s22, 1
      // Predicated region
      $region13: #{sfm_block_forward.3} parent=11 // pred_check
        %p439 = pneg %p167
      $region14: #{sfm_block_forward.3} parent=11 // pred_check_branch
        %441 = sbr.rel (%p439) target = $region16
      $region15: #{sfm_block_forward.3} parent=11 // pred_region
        _
      $region16: #{sfm_block_forward.3} parent=11 // pred_fallthru
        _
      // Predicated region
      $region17: #{sfm_block_forward.3} parent=11 // pred_check
        %p442 = pneg %p188
      $region18: #{sfm_block_forward.3} parent=11 // pred_check_branch
        %444 = sbr.rel (%p442) target = $region20
      $region19: #{sfm_block_forward.3} parent=11 // pred_region
        _
      $region20: #{sfm_block_forward.3} parent=11 // pred_fallthru
        _
      // Predicated region
      $region21: #{sfm_block_forward.3} parent=11 // pred_check
        %p445 = pneg %p209
      $region22: #{sfm_block_forward.3} parent=11 // pred_check_branch
        %447 = sbr.rel (%p445) target = $region24
      $region23: #{sfm_block_forward.3} parent=11 // pred_region
        _
      $region24: #{sfm_block_forward.3} parent=11 // pred_fallthru
        _
      // Predicated region
      $region25: #{sfm_block_forward.3} parent=11 // pred_check
        %p448 = pneg %p230
      $region26: #{sfm_block_forward.3} parent=11 // pred_check_branch
        %450 = sbr.rel (%p448) target = $region28
      $region27: #{sfm_block_forward.3} parent=11 // pred_region
        _
      $region28: #{sfm_block_forward.3} parent=11 // pred_fallthru
        _
      // Predicated region
      $region29: #{sfm_block_forward.3} parent=11 // pred_check
        %p451 = pneg %p251
      $region30: #{sfm_block_forward.3} parent=11 // pred_check_branch
        %453 = sbr.rel (%p451) target = $region32
      $region31: #{sfm_block_forward.3} parent=11 // pred_region
        _
      $region32: #{sfm_block_forward.3} parent=11 // pred_fallthru
        _
      // Predicated region
      $region33: #{sfm_block_forward.3} parent=11 // pred_check
        %p454 = pneg %p272
      $region34: #{sfm_block_forward.3} parent=11 // pred_check_branch
        %456 = sbr.rel (%p454) target = $region36
      $region35: #{sfm_block_forward.3} parent=11 // pred_region
        _
      $region36: #{sfm_block_forward.3} parent=11 // pred_fallthru
        _
      // Predicated region
      $region37: #{sfm_block_forward.3} parent=11 // pred_check
        %p457 = pneg %p293
      $region38: #{sfm_block_forward.3} parent=11 // pred_check_branch
        %459 = sbr.rel (%p457) target = $region40
      $region39: #{sfm_block_forward.3} parent=11 // pred_region
        _
      $region40: #{sfm_block_forward.3} parent=11 // pred_fallthru
        _
      // Predicated region
      $region41: #{sfm_block_forward.3} parent=11 // pred_check
        %p460 = pneg %p314
      $region42: #{sfm_block_forward.3} parent=11 // pred_check_branch
        %462 = sbr.rel (%p460) target = $region44
      $region43: #{sfm_block_forward.3} parent=11 // pred_region
        _
      $region44: #{sfm_block_forward.3} parent=11 // pred_fallthru
        _
      // Predicated region
      $region45: #{sfm_block_forward.3} parent=11 // pred_check
        %p463 = pneg %p335
      $region46: #{sfm_block_forward.3} parent=11 // pred_check_branch
        %465 = sbr.rel (%p463) target = $region48
      $region47: #{sfm_block_forward.3} parent=11 // pred_region
        _
      $region48: #{sfm_block_forward.3} parent=11 // pred_fallthru
        _
      // Predicated region
      $region49: #{sfm_block_forward.3} parent=11 // pred_check
        %p466 = pneg %p356
      $region50: #{sfm_block_forward.3} parent=11 // pred_check_branch
        %468 = sbr.rel (%p466) target = $region52
      $region51: #{sfm_block_forward.3} parent=11 // pred_region
        _
      $region52: #{sfm_block_forward.3} parent=11 // pred_fallthru
        _
      // Predicated region
      $region53: #{sfm_block_forward.3} parent=11 // pred_check
        %p469 = pneg %p377
      $region54: #{sfm_block_forward.3} parent=11 // pred_check_branch
        %471 = sbr.rel (%p469) target = $region56
      $region55: #{sfm_block_forward.3} parent=11 // pred_region
        _
      $region56: #{sfm_block_forward.3} parent=11 // pred_fallthru
        _
      // Predicated region
      $region57: #{sfm_block_forward.3} parent=11 // pred_check
        %p472 = pneg %p398
      $region58: #{sfm_block_forward.3} parent=11 // pred_check_branch
        %474 = sbr.rel (%p472) target = $region60
      $region59: #{sfm_block_forward.3} parent=11 // pred_region
        _
      $region60: #{sfm_block_forward.3} parent=11 // pred_fallthru
        _
    $region12: #{sfm_block_forward.3} parent=5 // pred_fallthru
      _
    %p475 = scmp.lt.s32.totalorder %s22, 4
    // Predicated region
    $region61: #{sfm_block_forward.3} parent=5 // pred_check
      %p476 = pneg %p475
    $region62: #{sfm_block_forward.3} parent=5 // pred_check_branch
      %478 = sbr.rel (%p476) target = $region64
    $region63: #{sfm_block_forward.3} parent=5 // pred_region
      // Predicated region
      $region65: #{sfm_block_forward.3} parent=63 // pred_check
        %p479 = pneg %p56
      $region66: #{sfm_block_forward.3} parent=63 // pred_check_branch
        %481 = sbr.rel (%p479) target = $region68
      $region67: #{sfm_block_forward.3} parent=63 // pred_region
        %p482 = scmp.lt.s32.totalorder %s29, 1
        %s483 = scalar_select %p482, %s29, 1
        %p484 = scmp.lt.s32.totalorder %s30, 1
        %s485 = scalar_select %p484, %s30, 1
        %s486 = smul.addr %s483, 2
        %s487 = sadd.s32 %s485, %s486
        %s488 = smul.addr %s487, 4
        %s489 = scalar_lea.vmem %s0, %s488
      $region68: #{sfm_block_forward.3} parent=63 // pred_fallthru
        _
      // Predicated region
      $region69: #{sfm_block_forward.3} parent=63 // pred_check
        %p490 = pneg %p84
      $region70: #{sfm_block_forward.3} parent=63 // pred_check_branch
        %492 = sbr.rel (%p490) target = $region72
      $region71: #{sfm_block_forward.3} parent=63 // pred_region
        %p493 = scmp.lt.s32.totalorder %s29, 1
        %s494 = scalar_select %p493, %s29, 1
        %p495 = scmp.lt.s32.totalorder %s30, 1
        %s496 = scalar_select %p495, %s30, 1
        %s497 = smul.addr %s494, 2
        %s498 = sadd.s32 %s496, %s497
        %s499 = smul.addr %s498, 4
        %s500 = scalar_lea.vmem %s1, %s499
      $region72: #{sfm_block_forward.3} parent=63 // pred_fallthru
        _
      // Predicated region
      $region73: #{sfm_block_forward.3} parent=63 // pred_check
        %p501 = pneg %p112
      $region74: #{sfm_block_forward.3} parent=63 // pred_check_branch
        %503 = sbr.rel (%p501) target = $region76
      $region75: #{sfm_block_forward.3} parent=63 // pred_region
        %p504 = scmp.lt.s32.totalorder %s29, 1
        %s505 = scalar_select %p504, %s29, 1
        %p506 = scmp.lt.s32.totalorder %s30, 1
        %s507 = scalar_select %p506, %s30, 1
        %s508 = smul.addr %s505, 2
        %s509 = sadd.s32 %s507, %s508
        %s510 = smul.addr %s509, 2
        %s511 = scalar_lea.vmem %s2, %s510
      $region76: #{sfm_block_forward.3} parent=63 // pred_fallthru
        _
      // Predicated region
      $region77: #{sfm_block_forward.3} parent=63 // pred_check
        %p512 = pneg %p140
      $region78: #{sfm_block_forward.3} parent=63 // pred_check_branch
        %514 = sbr.rel (%p512) target = $region80
      $region79: #{sfm_block_forward.3} parent=63 // pred_region
        %p515 = scmp.lt.s32.totalorder %s29, 1
        %s516 = scalar_select %p515, %s29, 1
        %p517 = scmp.lt.s32.totalorder %s30, 1
        %s518 = scalar_select %p517, %s30, 1
        %s519 = smul.addr %s516, 2
        %s520 = sadd.s32 %s518, %s519
        %s521 = smul.addr %s520, 2
        %s522 = scalar_lea.vmem %s3, %s521
      $region80: #{sfm_block_forward.3} parent=63 // pred_fallthru
        _
    $region64: #{sfm_block_forward.3} parent=5 // pred_fallthru
      _
    %p523 = scmp.le.s32.totalorder 1, %s22
    %p524 = scmp.lt.s32.totalorder %s22, 5
    %p525 = pnand %p523, %p524
    %p526 = pneg %p525
    // Predicated region
    $region81: #{sfm_block_forward.3} parent=5 // pred_check
      _
    $region82: #{sfm_block_forward.3} parent=5 // pred_check_branch
      %528 = sbr.rel (%p525) target = $region84
    $region83: #{sfm_block_forward.3} parent=5 // pred_region
      %s529 = ssub.s32 %s22, 1
      %p530 = scmp.lt.s32.totalorder %s31, 1
      %s531 = scalar_select %p530, %s31, 1
      %p532 = scmp.lt.s32.totalorder %s32, 1
      %s533 = scalar_select %p532, %s32, 1
      %s534 = smul.addr %s531, 2
      %s535 = sadd.s32 %s533, %s534
      %s536 = smul.addr %s535, 4
      %s537 = scalar_lea.vmem %s0, %s536
      %p538 = pneg %p62
      %p539 = pneg %p59
      %p540 = scmp.lt.s32.totalorder %s31, 1
      %s541 = scalar_select %p540, %s31, 1
      %p542 = scmp.lt.s32.totalorder %s32, 1
      %s543 = scalar_select %p542, %s32, 1
      %s544 = smul.addr %s541, 2
      %s545 = sadd.s32 %s543, %s544
      %s546 = smul.addr %s545, 4
      %s547 = scalar_lea.vmem %s1, %s546
      %p548 = pneg %p90
      %p549 = pneg %p87
      %p550 = scmp.lt.s32.totalorder %s31, 1
      %s551 = scalar_select %p550, %s31, 1
      %p552 = scmp.lt.s32.totalorder %s32, 1
      %s553 = scalar_select %p552, %s32, 1
      %s554 = smul.addr %s551, 2
      %s555 = sadd.s32 %s553, %s554
      %s556 = smul.addr %s555, 2
      %s557 = scalar_lea.vmem %s2, %s556
      %p558 = pneg %p118
      %p559 = pneg %p115
      %p560 = scmp.lt.s32.totalorder %s31, 1
      %s561 = scalar_select %p560, %s31, 1
      %p562 = scmp.lt.s32.totalorder %s32, 1
      %s563 = scalar_select %p562, %s32, 1
      %s564 = smul.addr %s561, 2
      %s565 = sadd.s32 %s563, %s564
      %s566 = smul.addr %s565, 2
      %s567 = scalar_lea.vmem %s3, %s566
      %p568 = pneg %p146
      %p569 = pneg %p143
      %p570 = pneg %p167
      %p571 = pneg %p164
      %p572 = pneg %p188
      %p573 = pneg %p185
      %p574 = pneg %p209
      %p575 = pneg %p206
      %p576 = pneg %p230
      %p577 = pneg %p227
      %p578 = pneg %p251
      %p579 = pneg %p248
      %p580 = pneg %p272
      %p581 = pneg %p269
      %p582 = pneg %p293
      %p583 = pneg %p290
      %p584 = pneg %p314
      %p585 = pneg %p311
      %p586 = pneg %p335
      %p587 = pneg %p332
      %p588 = pneg %p356
      %p589 = pneg %p353
      %p590 = pneg %p377
      %p591 = pneg %p374
      %p592 = pneg %p398
      %p593 = pneg %p395
      %p594 = pneg %p424
      %p595 = pneg %p421
      %p596 = scmp.lt.s32.totalorder %s31, 1
      %s597 = scalar_select %p596, %s31, 1
      %s598 = smul.addr %s597, 4
      %s599 = scalar_lea.vmem %s16, %s598
      %p600 = scmp.lt.s32.totalorder %s31, 1
      %s601 = scalar_select %p600, %s31, 1
      %p602 = scmp.lt.s32.totalorder %s32, 1
      %s603 = scalar_select %p602, %s32, 1
      %s604 = smul.addr %s601, 2
      %s605 = sadd.s32 %s603, %s604
      %s606 = smul.addr %s605, 4
      %s607 = scalar_lea.vmem %s0, %s606
      %p608 = scmp.lt.s32.totalorder %s31, 1
      %s609 = scalar_select %p608, %s31, 1
      %p610 = scmp.lt.s32.totalorder %s32, 1
      %s611 = scalar_select %p610, %s32, 1
      %s612 = smul.addr %s609, 2
      %s613 = sadd.s32 %s611, %s612
      %s614 = smul.addr %s613, 4
      %s615 = scalar_lea.vmem %s1, %s614
      %p616 = scmp.lt.s32.totalorder %s31, 1
      %s617 = scalar_select %p616, %s31, 1
      %p618 = scmp.lt.s32.totalorder %s32, 1
      %s619 = scalar_select %p618, %s32, 1
      %s620 = smul.addr %s617, 2
      %s621 = sadd.s32 %s619, %s620
      %s622 = smul.addr %s621, 2
      %s623 = scalar_lea.vmem %s2, %s622
      %p624 = scmp.lt.s32.totalorder %s31, 1
      %s625 = scalar_select %p624, %s31, 1
      %p626 = scmp.lt.s32.totalorder %s32, 1
      %s627 = scalar_select %p626, %s32, 1
      %s628 = smul.addr %s625, 2
      %s629 = sadd.s32 %s627, %s628
      %s630 = smul.addr %s629, 2
      %s631 = scalar_lea.vmem %s3, %s630
      %p632 = scmp.lt.s32.totalorder %s31, 1
      %s633 = scalar_select %p632, %s31, 1
      %s634 = smul.addr %s633, 4
      %s635 = scalar_lea.vmem %s16, %s634
      %v637 = vld [vmem:[%s607] sm:$0xf]
      %v638 = vld [vmem:[%s615] sm:$0xf]
      %v639 = vlaneseq
      %v640 = vand.u32 %v639, 127
      %s641 = smul.u32 %s32, 128
      %v642 = vstv %s641
      %v643 = vadd.s32 %v640, %v642
      %vm644 = vcmp.lt.s32.totalorder %v643, 144
      %p645 = scmp.eq.s32.totalorder %s32, 0
      // Predicated region
      $region85: #{sfm_block_forward.3} parent=83 // pred_check
        %p646 = pneg %p645
      $region86: #{sfm_block_forward.3} parent=83 // pred_check_branch
        %648 = sbr.rel (%p646) target = $region88
      $region87: #{sfm_block_forward.3} parent=83 // pred_region
        %649 = vst [vmem:[#allocation2] sm:$0xf] 0.0
        %650 = vst [vmem:[#allocation2 + $0x4] sm:$0xf] 0.0
        %651 = vst [vmem:[#allocation2 + $0x8] sm:$0xf] 0.0
        %652 = vst [vmem:[#allocation2 + $0xc] sm:$0xf] 0.0
        %653 = vst [vmem:[#allocation2 + $0x10] sm:$0xf] 0.0
        %654 = vst [vmem:[#allocation2 + $0x14] sm:$0xf] 0.0
        %v655 = vsel %vm644, %v637, 0.0
        %vm656 = vcmask 1043456
        %v657 = vsel %vm656, %v655, 0.0
        %658 = vadd.xlane.f32.xlu0 %v657
        %v659 = vpop.xlane.xlu0 %658
        %v660 = vmul.f32 %v659, 0.0078125
        %vm661 = vcmask 3072
        %662 = vst.msk [vmem:[#allocation3] sm:$0xf] %vm661, %v660
        %v663 = vsel %vm644, %v638, 0.0
        %v664 = vsel %vm656, %v663, 0.0
        %665 = vadd.xlane.f32.xlu0 %v664
        %v666 = vpop.xlane.xlu0 %665
        %v667 = vmul.f32 %v666, 0.0078125
        %s668 = scalar_lea.vmem [#allocation3], 4
        %669 = vst.msk [vmem:[%s668] sm:$0xf] %vm661, %v667
      $region88: #{sfm_block_forward.3} parent=83 // pred_fallthru
        _
      %v670 = vld [vmem:[#allocation3] sm:$0xf]
      %s671 = scalar_lea.vmem [#allocation3], 4
      %v672 = vld [vmem:[%s671] sm:$0xf]
      %674 = vset.pattern.permute.xlu0 0
      %675 = vperm.xlu0 %674, %v670
      %v676 = vpop.permute.xlu0 %675
      %v678 = vsub.f32 %v637, %v676
      %v679 = vsel %vm644, %v678, 0.0
      %681 = vset.pattern.permute.xlu0 0
      %682 = vperm.xlu0 %681, %v672
      %v683 = vpop.permute.xlu0 %682
      %v685 = vsub.f32 %v638, %v683
      %v686 = vsel %vm644, %v685, 0.0
      %v687 = vld [vmem:[%s4] sm:$0xf]
      %v688 = vpack.c.bf16 %v687, %v687
      %v689 = vld [vmem:[%s623] sm:$0x3]
      %v690 = vld [vmem:[%s5] sm:$0xf]
      %692 = vset.pattern.permute.xlu0 0
      %693 = vperm.xlu0 %692, %v690
      %v694 = vpop.permute.xlu0 %693
      %vm696 = vcmask 31744
      %v698 = vsel %vm696, %v688, 0
      %vm700 = vcmask 1041408
      %v702 = vsel %vm700, %v689, 0
      %704 = vmatpush.bf16.msra.mxu0 0
      %705 = vmatpush.bf16.msra.mxu0 0
      %706 = vmatpush.bf16.msra.mxu0 0
      %707 = vmatpush.bf16.msra.mxu0 0
      %708 = vmatpush.bf16.msra.mxu0 0
      %709 = vmatpush.bf16.msra.mxu0 0
      %710 = vmatpush.bf16.msra.mxu0 0
      %711 = vmatpush.bf16.msra.mxu0 %v702
      %712 = vmatmul.bf16.gmra.mxu0 %v698
      %v713 = vpop.f32.mrf.mxu0
      %v714 = vadd.f32 %v694, %v713
      %v715 = vpop.f32.mrf.mxu0
      %716 = vdwg.mxu0
      %v717 = vmax.f32 %v714, 0.0
      %v718 = vld [vmem:[%s6] sm:$0xf]
      %v719 = vpack.c.bf16 %v718, %v718
      %v720 = vld [vmem:[%s631] sm:$0x3]
      %v721 = vld [vmem:[%s7] sm:$0xf]
      %723 = vset.pattern.permute.xlu0 0
      %724 = vperm.xlu0 %723, %v721
      %v725 = vpop.permute.xlu0 %724
      %v728 = vsel %vm696, %v719, 0
      %v731 = vsel %vm700, %v720, 0
      %733 = vmatpush.bf16.msra.mxu0 0
      %734 = vmatpush.bf16.msra.mxu0 0
      %735 = vmatpush.bf16.msra.mxu0 0
      %736 = vmatpush.bf16.msra.mxu0 0
      %737 = vmatpush.bf16.msra.mxu0 0
      %738 = vmatpush.bf16.msra.mxu0 0
      %739 = vmatpush.bf16.msra.mxu0 0
      %740 = vmatpush.bf16.msra.mxu0 %v731
      %741 = vmatmul.bf16.gmra.mxu0 %v728
      %v742 = vpop.f32.mrf.mxu0
      %v743 = vadd.f32 %v725, %v742
      %v744 = vpop.f32.mrf.mxu0
      %745 = vdwg.mxu0
      %v746 = vmax.f32 %v743, 0.0
      %v747 = vsel %vm644, %v717, 0.0
      %v748 = vsel %vm644, %v746, 0.0
      %v749 = vld [vmem:[#allocation2] sm:$0xf]
      %v750 = vadd.f32 %v749, %v679
      %751 = vst [vmem:[#allocation2] sm:$0xf] %v750
      %s752 = scalar_lea.vmem [#allocation2], 4
      %v753 = vld [vmem:[%s752] sm:$0xf]
      %v754 = vmul.f32 %v679, %v679
      %v755 = vadd.f32 %v753, %v754
      %756 = vst [vmem:[%s752] sm:$0xf] %v755
      %s757 = scalar_lea.vmem [#allocation2], 8
      %v758 = vld [vmem:[%s757] sm:$0xf]
      %v759 = vadd.f32 %v758, %v686
      %760 = vst [vmem:[%s757] sm:$0xf] %v759
      %s761 = scalar_lea.vmem [#allocation2], 12
      %v762 = vld [vmem:[%s761] sm:$0xf]
      %v763 = vmul.f32 %v686, %v686
      %v764 = vadd.f32 %v762, %v763
      %765 = vst [vmem:[%s761] sm:$0xf] %v764
      %s766 = scalar_lea.vmem [#allocation2], 16
      %v767 = vld [vmem:[%s766] sm:$0xf]
      %v768 = vadd.f32 %v767, %v747
      %769 = vst [vmem:[%s766] sm:$0xf] %v768
      %s770 = scalar_lea.vmem [#allocation2], 20
      %v771 = vld [vmem:[%s770] sm:$0xf]
      %v772 = vadd.f32 %v771, %v748
      %773 = vst [vmem:[%s770] sm:$0xf] %v772
      %p774 = scmp.eq.s32.totalorder %s32, 1
      // Predicated region
      $region89: #{sfm_block_forward.3} parent=83 // pred_check
        %p775 = pneg %p774
      $region90: #{sfm_block_forward.3} parent=83 // pred_check_branch
        %777 = sbr.rel (%p775) target = $region92
      $region91: #{sfm_block_forward.3} parent=83 // pred_region
        %v778 = vld [vmem:[#allocation3] sm:$0xf]
        %v779 = vld [vmem:[#allocation2] sm:$0xf]
        %vm780 = vcmask 1043456
        %v781 = vsel %vm780, %v779, 0.0
        %782 = vadd.xlane.f32.xlu0 %v781
        %v783 = vpop.xlane.xlu0 %782
        %v784 = vmul.f32 %v783, 0.0069444445
        %v785 = vld [vmem:[%s752] sm:$0xf]
        %v786 = vsel %vm780, %v785, 0.0
        %787 = vadd.xlane.f32.xlu0 %v786
        %v788 = vpop.xlane.xlu0 %787
        %v789 = vmul.f32 %v788, 0.0069444445
        %v790 = vld [vmem:[%s766] sm:$0xf]
        %v791 = vsel %vm780, %v790, 0.0
        %792 = vadd.xlane.f32.xlu0 %v791
        %v793 = vpop.xlane.xlu0 %792
        %v794 = vmul.f32 %v793, 0.0069444445
        %v795 = vld [vmem:[%s8] sm:$0xf]
        %v796 = vld [vmem:[%s9] sm:$0xf]
        %v797 = vld [vmem:[%s10] sm:$0xf]
        %v798 = vld [vmem:[%s11] sm:$0xf]
        %v799 = vadd.f32 %v778, %v784
        %v800 = vmul.f32 %v784, %v784
        %v801 = vsub.f32 %v789, %v800
        %v802 = vmax.f32 %v801, 0.0
        %v803 = vadd.f32 %v802, 1e-05
        %v804 = vrsqrt.pop %v803
        %v805 = vmul.f32 %v804, %v803
        %v806 = vmul.f32 %v805, %v804
        %v807 = vmul.f32 0.5, %v806
        %v808 = vsub.f32 1.5, %v807
        %v809 = vmul.f32 %v804, %v808
        %vm810 = vweird.f32 %v803
        %vm811 = vweird.f32 %v804
        %vm812 = vmor %vm810, %vm811
        %v813 = vsel %vm812, %v804, %v809
        %v815 = vsel %vm696, %v795, 0
        %v818 = vsel %vm780, %v794, 0
        %820 = vmatpush.msra.mxu0 0.0
        %821 = vmatpush.msra.mxu0 0.0
        %822 = vmatpush.msra.mxu0 0.0
        %823 = vmatpush.msra.mxu0 0.0
        %824 = vmatpush.msra.mxu0 0.0
        %825 = vmatpush.msra.mxu0 0.0
        %826 = vmatpush.msra.mxu0 0.0
        %827 = vmatpush.msra.mxu0 0.0
        %828 = vmatpush.msra.mxu0 0.0
        %829 = vmatpush.msra.mxu0 0.0
        %830 = vmatpush.msra.mxu0 0.0
        %831 = vmatpush.msra.mxu0 0.0
        %832 = vmatpush.msra.mxu0 0.0
        %833 = vmatpush.msra.mxu0 0.0
        %834 = vmatpush.msra.mxu0 0.0
        %835 = vmatpush.msra.mxu0 %v818
        %836 = vmatmul.f32.gmra.mxu0 %v815
        %v837 = vpop.f32.mrf.mxu0
        %v838 = vadd.f32 %v796, %v837
        %839 = vdwg.mxu0
        %v841 = vsel %vm696, %v797, 0
        %843 = vmatpush.msra.mxu0 0.0
        %844 = vmatpush.msra.mxu0 0.0
        %845 = vmatpush.msra.mxu0 0.0
        %846 = vmatpush.msra.mxu0 0.0
        %847 = vmatpush.msra.mxu0 0.0
        %848 = vmatpush.msra.mxu0 0.0
        %849 = vmatpush.msra.mxu0 0.0
        %850 = vmatpush.msra.mxu0 0.0
        %851 = vmatpush.msra.mxu0 0.0
        %852 = vmatpush.msra.mxu0 0.0
        %853 = vmatpush.msra.mxu0 0.0
        %854 = vmatpush.msra.mxu0 0.0
        %855 = vmatpush.msra.mxu0 0.0
        %856 = vmatpush.msra.mxu0 0.0
        %857 = vmatpush.msra.mxu0 0.0
        %858 = vmatpush.msra.mxu0 %v818
        %859 = vmatmul.f32.gmra.mxu0 %v841
        %v860 = vpop.f32.mrf.mxu0
        %v861 = vadd.f32 %v798, %v860
        %862 = vdwg.mxu0
        %v863 = vadd.f32 %v838, 1.0
        %v864 = vmul.f32 %v813, %v863
        %v865 = vmul.f32 %v799, %v864
        %v866 = vsub.f32 %v861, %v865
        %v867 = vld [vmem:[%s671] sm:$0xf]
        %v868 = vld [vmem:[%s757] sm:$0xf]
        %v869 = vsel %vm780, %v868, 0.0
        %870 = vadd.xlane.f32.xlu0 %v869
        %v871 = vpop.xlane.xlu0 %870
        %v872 = vmul.f32 %v871, 0.0069444445
        %v873 = vld [vmem:[%s761] sm:$0xf]
        %v874 = vsel %vm780, %v873, 0.0
        %875 = vadd.xlane.f32.xlu0 %v874
        %v876 = vpop.xlane.xlu0 %875
        %v877 = vmul.f32 %v876, 0.0069444445
        %v878 = vld [vmem:[%s770] sm:$0xf]
        %v879 = vsel %vm780, %v878, 0.0
        %880 = vadd.xlane.f32.xlu0 %v879
        %v881 = vpop.xlane.xlu0 %880
        %v882 = vmul.f32 %v881, 0.0069444445
        %v883 = vld [vmem:[%s12] sm:$0xf]
        %v884 = vld [vmem:[%s13] sm:$0xf]
        %v885 = vld [vmem:[%s14] sm:$0xf]
        %v886 = vld [vmem:[%s15] sm:$0xf]
        %v887 = vadd.f32 %v867, %v872
        %v888 = vmul.f32 %v872, %v872
        %v889 = vsub.f32 %v877, %v888
        %v890 = vmax.f32 %v889, 0.0
        %v891 = vadd.f32 %v890, 1e-05
        %v892 = vrsqrt.pop %v891
        %v893 = vmul.f32 %v892, %v891
        %v894 = vmul.f32 %v893, %v892
        %v895 = vmul.f32 0.5, %v894
        %v896 = vsub.f32 1.5, %v895
        %v897 = vmul.f32 %v892, %v896
        %vm898 = vweird.f32 %v891
        %vm899 = vweird.f32 %v892
        %vm900 = vmor %vm898, %vm899
        %v901 = vsel %vm900, %v892, %v897
        %v903 = vsel %vm696, %v883, 0
        %v906 = vsel %vm780, %v882, 0
        %908 = vmatpush.msra.mxu0 0.0
        %909 = vmatpush.msra.mxu0 0.0
        %910 = vmatpush.msra.mxu0 0.0
        %911 = vmatpush.msra.mxu0 0.0
        %912 = vmatpush.msra.mxu0 0.0
        %913 = vmatpush.msra.mxu0 0.0
        %914 = vmatpush.msra.mxu0 0.0
        %915 = vmatpush.msra.mxu0 0.0
        %916 = vmatpush.msra.mxu0 0.0
        %917 = vmatpush.msra.mxu0 0.0
        %918 = vmatpush.msra.mxu0 0.0
        %919 = vmatpush.msra.mxu0 0.0
        %920 = vmatpush.msra.mxu0 0.0
        %921 = vmatpush.msra.mxu0 0.0
        %922 = vmatpush.msra.mxu0 0.0
        %923 = vmatpush.msra.mxu0 %v906
        %924 = vmatmul.f32.gmra.mxu0 %v903
        %v925 = vpop.f32.mrf.mxu0
        %v926 = vadd.f32 %v884, %v925
        %927 = vdwg.mxu0
        %v929 = vsel %vm696, %v885, 0
        %931 = vmatpush.msra.mxu0 0.0
        %932 = vmatpush.msra.mxu0 0.0
        %933 = vmatpush.msra.mxu0 0.0
        %934 = vmatpush.msra.mxu0 0.0
        %935 = vmatpush.msra.mxu0 0.0
        %936 = vmatpush.msra.mxu0 0.0
        %937 = vmatpush.msra.mxu0 0.0
        %938 = vmatpush.msra.mxu0 0.0
        %939 = vmatpush.msra.mxu0 0.0
        %940 = vmatpush.msra.mxu0 0.0
        %941 = vmatpush.msra.mxu0 0.0
        %942 = vmatpush.msra.mxu0 0.0
        %943 = vmatpush.msra.mxu0 0.0
        %944 = vmatpush.msra.mxu0 0.0
        %945 = vmatpush.msra.mxu0 0.0
        %946 = vmatpush.msra.mxu0 %v906
        %947 = vmatmul.f32.gmra.mxu0 %v929
        %v948 = vpop.f32.mrf.mxu0
        %v949 = vadd.f32 %v886, %v948
        %950 = vdwg.mxu0
        %v951 = vadd.f32 %v926, 1.0
        %v952 = vmul.f32 %v901, %v951
        %v953 = vmul.f32 %v887, %v952
        %v954 = vsub.f32 %v949, %v953
        %vm955 = vcmp.eq.s32.totalorder %v640, 0
        %957 = vset.pattern.permute.xlu0 0
        %958 = vperm.xlu0 %957, %v864
        %v959 = vpop.permute.xlu0 %958
        %v961 = vsel %vm955, %v959, 0.0
        %vm962 = vcmp.eq.s32.totalorder %v640, 1
        %964 = vset.pattern.permute.xlu0 0
        %965 = vperm.xlu0 %964, %v866
        %v966 = vpop.permute.xlu0 %965
        %v968 = vsel %vm962, %v966, %v961
        %vm969 = vcmp.eq.s32.totalorder %v640, 2
        %971 = vset.pattern.permute.xlu0 0
        %972 = vperm.xlu0 %971, %v952
        %v973 = vpop.permute.xlu0 %972
        %v975 = vsel %vm969, %v973, %v968
        %vm976 = vcmp.eq.s32.totalorder %v640, 3
        %978 = vset.pattern.permute.xlu0 0
        %979 = vperm.xlu0 %978, %v954
        %v980 = vpop.permute.xlu0 %979
        %v982 = vsel %vm976, %v980, %v975
        %vm983 = vcmask 27648
        %984 = vst.msk [vmem:[%s635] sm:$0xf] %vm983, %v982
      $region92: #{sfm_block_forward.3} parent=83 // pred_fallthru
        _
      %p985 = scmp.lt.s32.totalorder %s31, 1
      %s986 = scalar_select %p985, %s31, 1
      %s987 = smul.addr %s986, 4
      %s988 = scalar_lea.vmem %s16, %s987
      // Predicated region
      $region93: #{sfm_block_forward.3} parent=83 // pred_check
        %p989 = pneg %p421
      $region94: #{sfm_block_forward.3} parent=83 // pred_check_branch
        %991 = sbr.rel (%p989) target = $region96
      $region95: #{sfm_block_forward.3} parent=83 // pred_region
        _
      $region96: #{sfm_block_forward.3} parent=83 // pred_fallthru
        _
    $region84: #{sfm_block_forward.3} parent=5 // pred_fallthru
      _
    %p992 = scmp.le.s32.totalorder 2, %s22
    // Predicated region
    $region97: #{sfm_block_forward.3} parent=5 // pred_check
      %p993 = pneg %p992
    $region98: #{sfm_block_forward.3} parent=5 // pred_check_branch
      %995 = sbr.rel (%p993) target = $region100
    $region99: #{sfm_block_forward.3} parent=5 // pred_region
      %s996 = ssub.s32 %s22, 2
      // Predicated region
      $region101: #{sfm_block_forward.3} parent=99 // pred_check
        %p997 = pneg %p427
      $region102: #{sfm_block_forward.3} parent=99 // pred_check_branch
        %999 = sbr.rel (%p997) target = $region104
      $region103: #{sfm_block_forward.3} parent=99 // pred_region
        %p1000 = scmp.lt.s32.totalorder %s33, 1
        %s1001 = scalar_select %p1000, %s33, 1
        %s1002 = smul.addr %s1001, 4
        %s1003 = scalar_lea.vmem %s16, %s1002
      $region104: #{sfm_block_forward.3} parent=99 // pred_fallthru
        _
    $region100: #{sfm_block_forward.3} parent=5 // pred_fallthru
      _
  $region6: #{sfm_block_forward.3} parent=0 // loop_footer
    %s26 = sadd.s32 1, %s22
  $region7: #{sfm_block_forward.3} parent=0 // loop_footer_branch
    %21 = sbr.rel target = $region3
  $region8: #{sfm_block_forward.3} parent=0 // loop_exit
    _

// kernel: sfm_block_forward.5
$region0: #{sfm_block_forward.5}
  #allocation0 [shape = 'u32[]', space=smem, size = 0x4, offset = 0x4, fixed_abs, tag = 'smem constant byte address 0x4 - core index']
  #allocation1 [shape = 'u32[72,128]{1,0:T(1,128)}', space=vmem, size = 0x9000, scoped, tag = 'internal scratch']
  %s0 = inlined_call_operand.vmem [shape: f32[2,4,256], index: 0, kind: input, shape index: {}]
  %s1 = inlined_call_operand.vmem [shape: f32[2,4,256], index: 1, kind: input, shape index: {}]
  %s2 = inlined_call_operand.vmem [shape: f32[4,8], index: 2, kind: input, shape index: {}]
  %s3 = inlined_call_operand.vmem [shape: f32[4,1], index: 3, kind: input, shape index: {}]
  %s4 = inlined_call_operand.vmem [shape: f32[2,4,256], index: 4, kind: output, shape index: {}]
  %s5 = sld [smem:[#allocation0]]
  $region49: #{sfm_block_forward.5} parent=0
    _
  %s7 = ssub.s32 1, %s5
  %s8 = scalar_select 0, %s7, %s5
  loop: start=0, step=1, limit=4
  $region2: #{sfm_block_forward.5} parent=0 // loop_pre_header
    _
  $region3: #{sfm_block_forward.5} parent=0 // loop_header
    %s10 = sphi 0, %s14
    %p11 = scmp.ge.s32.totalorder %s10, 4
    %s17 = sphi 0, %s29
    %s18 = sphi 0, %s25
    %s19 = sphi 0, %s17
    %s20 = sphi 0, %s18
    %s21 = sphi 0, %s19
    %s22 = sphi 0, %s20
    %s34 = sphi 0, %s36
    %s37 = sphi 0, %s34
    %s38 = sphi 0, %s37
    %s54 = sphi 0, %s38
    %s62 = sphi 0, %s64
    %s65 = sphi 0, %s62
    %s66 = sphi 0, %s65
    %s82 = sphi 0, %s66
    %s86 = sphi 0, %s86
    %s88 = sphi 0, %s86
    %s89 = sphi 0, %s88
    %s103 = sphi 0, %s89
    %s107 = sphi 0, %s107
    %s109 = sphi 0, %s107
    %s110 = sphi 0, %s109
    %s124 = sphi 0, %s110
    %s132 = sphi 0, %s134
    %s135 = sphi 0, %s132
    %s136 = sphi 0, %s135
    %s152 = sphi 0, %s136
  $region4: #{sfm_block_forward.5} parent=0 // loop_header_branch
    %13 = sbr.rel (%p11) target = $region8
  $region5: #{sfm_block_forward.5} parent=0 // loop_body
    %s15 = ssub.s32 %s10, 1
    %s16 = ssub.s32 %s10, 2
    %s23 = sadd.s32 1, %s18
    %p24 = scmp.ge.s32.totalorder %s23, 1
    %s25 = scalar_select %p24, 0, %s23
    %s26 = sadd.s32 1, %s17
    %s27 = scalar_select %p24, %s26, %s17
    %p28 = scmp.ge.s32.totalorder %s27, 2
    %s29 = scalar_select %p28, 0, %s27
    %s30 = ssub.s32 %s17, %s29
    %s31 = ssub.s32 %s18, %s25
    %s32 = sor.u32 %s30, %s31
    %p33 = scmp.eq.s32.totalorder %s32, 0
    %s35 = sadd.s32 %s34, 1
    %s36 = scalar_select %p33, %s34, %s35
    %p39 = pneg %p33
    %p40 = scmp.eq.s32.totalorder %s10, 1
    %p41 = por %p39, %p40
    %p42 = scmp.ne.s32.totalorder %s34, %s37
    %p43 = scmp.eq.s32.totalorder %s10, 0
    %p44 = por %p42, %p43
    %p45 = scmp.ne.s32.totalorder %s34, %s37
    %p46 = scmp.eq.s32.totalorder %s15, 1
    %p47 = por %p45, %p46
    %p48 = scmp.ne.s32.totalorder %s37, %s38
    %p49 = scmp.eq.s32.totalorder %s15, 0
    %p50 = por %p48, %p49
    %p51 = scmp.ne.s32.totalorder %s37, %s38
    %p52 = scmp.eq.s32.totalorder %s16, 1
    %p53 = por %p51, %p52
    %p55 = scmp.ne.s32.totalorder %s38, %s54
    %p56 = scmp.eq.s32.totalorder %s16, 0
    %p57 = por %p55, %p56
    %s58 = ssub.s32 %s17, %s29
    %s59 = ssub.s32 %s18, %s25
    %s60 = sor.u32 %s58, %s59
    %p61 = scmp.eq.s32.totalorder %s60, 0
    %s63 = sadd.s32 %s62, 1
    %s64 = scalar_select %p61, %s62, %s63
    %p67 = pneg %p61
    %p68 = scmp.eq.s32.totalorder %s10, 1
    %p69 = por %p67, %p68
    %p70 = scmp.ne.s32.totalorder %s62, %s65
    %p71 = scmp.eq.s32.totalorder %s10, 0
    %p72 = por %p70, %p71
    %p73 = scmp.ne.s32.totalorder %s62, %s65
    %p74 = scmp.eq.s32.totalorder %s15, 1
    %p75 = por %p73, %p74
    %p76 = scmp.ne.s32.totalorder %s65, %s66
    %p77 = scmp.eq.s32.totalorder %s15, 0
    %p78 = por %p76, %p77
    %p79 = scmp.ne.s32.totalorder %s65, %s66
    %p80 = scmp.eq.s32.totalorder %s16, 1
    %p81 = por %p79, %p80
    %p83 = scmp.ne.s32.totalorder %s66, %s82
    %p84 = scmp.eq.s32.totalorder %s16, 0
    %p85 = por %p83, %p84
    %s87 = sadd.s32 %s86, 1
    %p90 = scmp.eq.s32.totalorder %s10, 1
    %p91 = scmp.ne.s32.totalorder %s86, %s88
    %p92 = scmp.eq.s32.totalorder %s10, 0
    %p93 = por %p91, %p92
    %p94 = scmp.ne.s32.totalorder %s86, %s88
    %p95 = scmp.eq.s32.totalorder %s15, 1
    %p96 = por %p94, %p95
    %p97 = scmp.ne.s32.totalorder %s88, %s89
    %p98 = scmp.eq.s32.totalorder %s15, 0
    %p99 = por %p97, %p98
    %p100 = scmp.ne.s32.totalorder %s88, %s89
    %p101 = scmp.eq.s32.totalorder %s16, 1
    %p102 = por %p100, %p101
    %p104 = scmp.ne.s32.totalorder %s89, %s103
    %p105 = scmp.eq.s32.totalorder %s16, 0
    %p106 = por %p104, %p105
    %s108 = sadd.s32 %s107, 1
    %p111 = scmp.eq.s32.totalorder %s10, 1
    %p112 = scmp.ne.s32.totalorder %s107, %s109
    %p113 = scmp.eq.s32.totalorder %s10, 0
    %p114 = por %p112, %p113
    %p115 = scmp.ne.s32.totalorder %s107, %s109
    %p116 = scmp.eq.s32.totalorder %s15, 1
    %p117 = por %p115, %p116
    %p118 = scmp.ne.s32.totalorder %s109, %s110
    %p119 = scmp.eq.s32.totalorder %s15, 0
    %p120 = por %p118, %p119
    %p121 = scmp.ne.s32.totalorder %s109, %s110
    %p122 = scmp.eq.s32.totalorder %s16, 1
    %p123 = por %p121, %p122
    %p125 = scmp.ne.s32.totalorder %s110, %s124
    %p126 = scmp.eq.s32.totalorder %s16, 0
    %p127 = por %p125, %p126
    %s128 = ssub.s32 %s17, %s29
    %s129 = ssub.s32 %s18, %s25
    %s130 = sor.u32 %s128, %s129
    %p131 = scmp.eq.s32.totalorder %s130, 0
    %s133 = sadd.s32 %s132, 1
    %s134 = scalar_select %p131, %s132, %s133
    %p137 = pneg %p131
    %p138 = scmp.eq.s32.totalorder %s10, 1
    %p139 = por %p137, %p138
    %p140 = scmp.ne.s32.totalorder %s132, %s135
    %p141 = scmp.eq.s32.totalorder %s10, 0
    %p142 = por %p140, %p141
    %p143 = scmp.ne.s32.totalorder %s132, %s135
    %p144 = scmp.eq.s32.totalorder %s15, 1
    %p145 = por %p143, %p144
    %p146 = scmp.ne.s32.totalorder %s135, %s136
    %p147 = scmp.eq.s32.totalorder %s15, 0
    %p148 = por %p146, %p147
    %p149 = scmp.ne.s32.totalorder %s135, %s136
    %p150 = scmp.eq.s32.totalorder %s16, 1
    %p151 = por %p149, %p150
    %p153 = scmp.ne.s32.totalorder %s136, %s152
    %p154 = scmp.eq.s32.totalorder %s16, 0
    %p155 = por %p153, %p154
    %p156 = scmp.le.s32.totalorder 1, %s10
    %p157 = scmp.lt.s32.totalorder %s10, 3
    %p158 = pnand %p156, %p157
    %p159 = pneg %p158
    // Predicated region
    $region9: #{sfm_block_forward.5} parent=5 // pred_check
      _
    $region10: #{sfm_block_forward.5} parent=5 // pred_check_branch
      %161 = sbr.rel (%p158) target = $region12
    $region11: #{sfm_block_forward.5} parent=5 // pred_region
      %s162 = ssub.s32 %s10, 1
      // Predicated region
      $region13: #{sfm_block_forward.5} parent=11 // pred_check
        %p163 = pneg %p99
      $region14: #{sfm_block_forward.5} parent=11 // pred_check_branch
        %165 = sbr.rel (%p163) target = $region16
      $region15: #{sfm_block_forward.5} parent=11 // pred_region
        _
      $region16: #{sfm_block_forward.5} parent=11 // pred_fallthru
        _
      // Predicated region
      $region17: #{sfm_block_forward.5} parent=11 // pred_check
        %p166 = pneg %p120
      $region18: #{sfm_block_forward.5} parent=11 // pred_check_branch
        %168 = sbr.rel (%p166) target = $region20
      $region19: #{sfm_block_forward.5} parent=11 // pred_region
        _
      $region20: #{sfm_block_forward.5} parent=11 // pred_fallthru
        _
    $region12: #{sfm_block_forward.5} parent=5 // pred_fallthru
      _
    %p169 = scmp.lt.s32.totalorder %s10, 2
    // Predicated region
    $region21: #{sfm_block_forward.5} parent=5 // pred_check
      %p170 = pneg %p169
    $region22: #{sfm_block_forward.5} parent=5 // pred_check_branch
      %172 = sbr.rel (%p170) target = $region24
    $region23: #{sfm_block_forward.5} parent=5 // pred_region
      // Predicated region
      $region25: #{sfm_block_forward.5} parent=23 // pred_check
        %p173 = pneg %p44
      $region26: #{sfm_block_forward.5} parent=23 // pred_check_branch
        %175 = sbr.rel (%p173) target = $region28
      $region27: #{sfm_block_forward.5} parent=23 // pred_region
        %s176 = smul.u32 2, %s18
        %p177 = scmp.lt.s32.totalorder %s17, 1
        %s178 = scalar_select %p177, %s17, 1
        %p179 = scmp.lt.s32.totalorder %s176, 1
        %s180 = scalar_select %p179, %s176, 1
        %s181 = smul.addr %s178, 2
        %s182 = sadd.s32 %s180, %s181
        %s183 = smul.addr %s182, 4
        %s184 = scalar_lea.vmem %s0, %s183
        %s185 = smul.u32 2, %s18
      $region28: #{sfm_block_forward.5} parent=23 // pred_fallthru
        _
      // Predicated region
      $region29: #{sfm_block_forward.5} parent=23 // pred_check
        %p186 = pneg %p72
      $region30: #{sfm_block_forward.5} parent=23 // pred_check_branch
        %188 = sbr.rel (%p186) target = $region32
      $region31: #{sfm_block_forward.5} parent=23 // pred_region
        %s189 = smul.u32 2, %s18
        %p190 = scmp.lt.s32.totalorder %s17, 1
        %s191 = scalar_select %p190, %s17, 1
        %p192 = scmp.lt.s32.totalorder %s189, 1
        %s193 = scalar_select %p192, %s189, 1
        %s194 = smul.addr %s191, 2
        %s195 = sadd.s32 %s193, %s194
        %s196 = smul.addr %s195, 4
        %s197 = scalar_lea.vmem %s1, %s196
        %s198 = smul.u32 2, %s18
      $region32: #{sfm_block_forward.5} parent=23 // pred_fallthru
        _
    $region24: #{sfm_block_forward.5} parent=5 // pred_fallthru
      _
    %p199 = scmp.le.s32.totalorder 1, %s10
    %p200 = scmp.lt.s32.totalorder %s10, 3
    %p201 = pnand %p199, %p200
    %p202 = pneg %p201
    // Predicated region
    $region33: #{sfm_block_forward.5} parent=5 // pred_check
      _
    $region34: #{sfm_block_forward.5} parent=5 // pred_check_branch
      %204 = sbr.rel (%p201) target = $region36
    $region35: #{sfm_block_forward.5} parent=5 // pred_region
      %s205 = ssub.s32 %s10, 1
      %s206 = smul.u32 2, %s20
      %p207 = scmp.lt.s32.totalorder %s19, 1
      %s208 = scalar_select %p207, %s19, 1
      %p209 = scmp.lt.s32.totalorder %s206, 1
      %s210 = scalar_select %p209, %s206, 1
      %s211 = smul.addr %s208, 2
      %s212 = sadd.s32 %s210, %s211
      %s213 = smul.addr %s212, 4
      %s214 = scalar_lea.vmem %s0, %s213
      %p215 = pneg %p50
      %p216 = pneg %p47
      %s217 = smul.u32 2, %s20
      %p218 = scmp.lt.s32.totalorder %s19, 1
      %s219 = scalar_select %p218, %s19, 1
      %p220 = scmp.lt.s32.totalorder %s217, 1
      %s221 = scalar_select %p220, %s217, 1
      %s222 = smul.addr %s219, 2
      %s223 = sadd.s32 %s221, %s222
      %s224 = smul.addr %s223, 4
      %s225 = scalar_lea.vmem %s1, %s224
      %p226 = pneg %p78
      %p227 = pneg %p75
      %p228 = pneg %p99
      %p229 = pneg %p96
      %p230 = pneg %p120
      %p231 = pneg %p117
      %p232 = pneg %p148
      %p233 = pneg %p145
      %s234 = smul.u32 2, %s20
      %p235 = scmp.lt.s32.totalorder %s19, 1
      %s236 = scalar_select %p235, %s19, 1
      %p237 = scmp.lt.s32.totalorder %s234, 1
      %s238 = scalar_select %p237, %s234, 1
      %s239 = smul.addr %s236, 2
      %s240 = sadd.s32 %s238, %s239
      %s241 = smul.addr %s240, 4
      %s242 = scalar_lea.vmem %s4, %s241
      %s243 = smul.u32 2, %s20
      %p244 = scmp.lt.s32.totalorder %s19, 1
      %s245 = scalar_select %p244, %s19, 1
      %p246 = scmp.lt.s32.totalorder %s243, 1
      %s247 = scalar_select %p246, %s243, 1
      %s248 = smul.addr %s245, 2
      %s249 = sadd.s32 %s247, %s248
      %s250 = smul.addr %s249, 4
      %s251 = scalar_lea.vmem %s0, %s250
      %s252 = smul.u32 2, %s20
      %s253 = smul.u32 2, %s20
      %p254 = scmp.lt.s32.totalorder %s19, 1
      %s255 = scalar_select %p254, %s19, 1
      %p256 = scmp.lt.s32.totalorder %s253, 1
      %s257 = scalar_select %p256, %s253, 1
      %s258 = smul.addr %s255, 2
      %s259 = sadd.s32 %s257, %s258
      %s260 = smul.addr %s259, 4
      %s261 = scalar_lea.vmem %s1, %s260
      %s262 = smul.u32 2, %s20
      %s263 = smul.u32 2, %s20
      %p264 = scmp.lt.s32.totalorder %s19, 1
      %s265 = scalar_select %p264, %s19, 1
      %p266 = scmp.lt.s32.totalorder %s263, 1
      %s267 = scalar_select %p266, %s263, 1
      %s268 = smul.addr %s265, 2
      %s269 = sadd.s32 %s267, %s268
      %s270 = smul.addr %s269, 4
      %s271 = scalar_lea.vmem %s4, %s270
      %s272 = smul.u32 2, %s20
      %v274 = vld [vmem:[%s251] sm:$0xff]
      %276 = vst [vmem:[#allocation1] ss:$2 sm:$0xff] %v274
      %v277 = vld.sshfl [vmem:[#allocation1] sm:$0xff pattern:$0x75316420]
      %v278 = vld.sshfl [vmem:[#allocation1 + $0x8] sm:$0xff pattern:$0x75316420]
      %v281 = vpack.c.bf16 %v277, %v277
      %v282 = vpack.c.bf16 %v278, %v278
      %v283 = vld [vmem:[%s261] sm:$0xff]
      %285 = vst [vmem:[#allocation1] ss:$2 sm:$0xff] %v283
      %v286 = vld.sshfl [vmem:[#allocation1] sm:$0xff pattern:$0x75316420]
      %v287 = vld.sshfl [vmem:[#allocation1 + $0x8] sm:$0xff pattern:$0x75316420]
      %v290 = vpack.c.bf16 %v286, %v286
      %v291 = vpack.c.bf16 %v287, %v287
      %v292 = vld [vmem:[%s2] sm:$0xf]
      %v293 = vpack.c.bf16 %v292, %v292
      %v295 = vunpack.c.l.b16 %v293
      %v296 = vpack.c.b16 %v295, %v295
      %297 = vrot.lane.b32.xlu0 %v296, 124
      %v298 = vpop.permute.xlu0 %297
      %vm299 = vcmask 31744
      %v301 = vsel %vm299, %v298, 0
      %vm303 = vcmask 1041408
      %v305 = vsel %vm303, %v290, 0
      %v308 = vsel %vm303, %v291, 0
      %310 = vmatpush.bf16.msra.mxu0 0
      %311 = vmatpush.bf16.msra.mxu0 0
      %312 = vmatpush.bf16.msra.mxu0 0
      %313 = vmatpush.bf16.msra.mxu0 0
      %314 = vmatpush.bf16.msra.mxu0 0
      %315 = vmatpush.bf16.msra.mxu0 0
      %316 = vmatpush.bf16.msra.mxu0 0
      %317 = vmatpush.bf16.msra.mxu0 %v305
      %318 = vmatmul.bf16.gmra.mxu0 %v301
      %v319 = vpop.f32.mrf.mxu0
      %v320 = vadd.f32 0.0, %v319
      %v321 = vpop.f32.mrf.mxu0
      %322 = vdwg.mxu0
      %323 = vmatpush.bf16.msra.mxu0 0
      %324 = vmatpush.bf16.msra.mxu0 0
      %325 = vmatpush.bf16.msra.mxu0 0
      %326 = vmatpush.bf16.msra.mxu0 0
      %327 = vmatpush.bf16.msra.mxu0 0
      %328 = vmatpush.bf16.msra.mxu0 0
      %329 = vmatpush.bf16.msra.mxu0 0
      %330 = vmatpush.bf16.msra.mxu0 %v308
      %331 = vmatmul.bf16.gmra.mxu0 %v301
      %v332 = vpop.f32.mrf.mxu0
      %v333 = vadd.f32 0.0, %v332
      %v334 = vpop.f32.mrf.mxu0
      %335 = vdwg.mxu0
      %v337 = vsel %vm299, %v293, 0
      %v340 = vsel %vm303, %v281, 0
      %v343 = vsel %vm303, %v282, 0
      %345 = vmatpush.bf16.msra.mxu0 0
      %346 = vmatpush.bf16.msra.mxu0 0
      %347 = vmatpush.bf16.msra.mxu0 0
      %348 = vmatpush.bf16.msra.mxu0 0
      %349 = vmatpush.bf16.msra.mxu0 0
      %350 = vmatpush.bf16.msra.mxu0 0
      %351 = vmatpush.bf16.msra.mxu0 0
      %352 = vmatpush.bf16.msra.mxu0 %v340
      %353 = vmatmul.bf16.gmra.mxu0 %v337
      %v354 = vpop.f32.mrf.mxu0
      %v355 = vadd.f32 %v320, %v354
      %v356 = vpop.f32.mrf.mxu0
      %357 = vdwg.mxu0
      %358 = vmatpush.bf16.msra.mxu0 0
      %359 = vmatpush.bf16.msra.mxu0 0
      %360 = vmatpush.bf16.msra.mxu0 0
      %361 = vmatpush.bf16.msra.mxu0 0
      %362 = vmatpush.bf16.msra.mxu0 0
      %363 = vmatpush.bf16.msra.mxu0 0
      %364 = vmatpush.bf16.msra.mxu0 0
      %365 = vmatpush.bf16.msra.mxu0 %v343
      %366 = vmatmul.bf16.gmra.mxu0 %v337
      %v367 = vpop.f32.mrf.mxu0
      %v368 = vadd.f32 %v333, %v367
      %v369 = vpop.f32.mrf.mxu0
      %370 = vdwg.mxu0
      %v371 = vld [vmem:[%s3] sm:$0xf]
      %373 = vset.pattern.permute.xlu0 0
      %374 = vperm.xlu0 %373, %v371
      %v375 = vpop.permute.xlu0 %374
      %v377 = vadd.f32 %v355, %v375
      %v378 = vadd.f32 %v368, %v375
      %v381 = vrot.slane %v378, 4
      %vm382 = vcmask 1043456
      %v383 = vsel %vm382, %v377, %v381
      %385 = vst [vmem:[%s271] sm:$0xff] %v383
      %s386 = smul.u32 2, %s20
      %p387 = scmp.lt.s32.totalorder %s19, 1
      %s388 = scalar_select %p387, %s19, 1
      %p389 = scmp.lt.s32.totalorder %s386, 1
      %s390 = scalar_select %p389, %s386, 1
      %s391 = smul.addr %s388, 2
      %s392 = sadd.s32 %s390, %s391
      %s393 = smul.addr %s392, 4
      %s394 = scalar_lea.vmem %s4, %s393
      // Predicated region
      $region37: #{sfm_block_forward.5} parent=35 // pred_check
        %p395 = pneg %p145
      $region38: #{sfm_block_forward.5} parent=35 // pred_check_branch
        %397 = sbr.rel (%p395) target = $region40
      $region39: #{sfm_block_forward.5} parent=35 // pred_region
        %s398 = smul.u32 2, %s20
      $region40: #{sfm_block_forward.5} parent=35 // pred_fallthru
        _
    $region36: #{sfm_block_forward.5} parent=5 // pred_fallthru
      _
    %p399 = scmp.le.s32.totalorder 2, %s10
    // Predicated region
    $region41: #{sfm_block_forward.5} parent=5 // pred_check
      %p400 = pneg %p399
    $region42: #{sfm_block_forward.5} parent=5 // pred_check_branch
      %402 = sbr.rel (%p400) target = $region44
    $region43: #{sfm_block_forward.5} parent=5 // pred_region
      %s403 = ssub.s32 %s10, 2
      // Predicated region
      $region45: #{sfm_block_forward.5} parent=43 // pred_check
        %p404 = pneg %p151
      $region46: #{sfm_block_forward.5} parent=43 // pred_check_branch
        %406 = sbr.rel (%p404) target = $region48
      $region47: #{sfm_block_forward.5} parent=43 // pred_region
        %s407 = smul.u32 2, %s22
        %p408 = scmp.lt.s32.totalorder %s21, 1
        %s409 = scalar_select %p408, %s21, 1
        %p410 = scmp.lt.s32.totalorder %s407, 1
        %s411 = scalar_select %p410, %s407, 1
        %s412 = smul.addr %s409, 2
        %s413 = sadd.s32 %s411, %s412
        %s414 = smul.addr %s413, 4
        %s415 = scalar_lea.vmem %s4, %s414
      $region48: #{sfm_block_forward.5} parent=43 // pred_fallthru
        _
    $region44: #{sfm_block_forward.5} parent=5 // pred_fallthru
      _
  $region6: #{sfm_block_forward.5} parent=0 // loop_footer
    %s14 = sadd.s32 1, %s10
  $region7: #{sfm_block_forward.5} parent=0 // loop_footer_branch
    %9 = sbr.rel target = $region3
  $region8: #{sfm_block_forward.5} parent=0 // loop_exit
    _

</llo_original>
